<compile_context>
chip_gen: v7x
topology: tpu7x:2x2x1
jax: 0.10.0
libtpu: 0.0.40
codegen_flags: <defaults>
</compile_context>

<pallas_src>
import math
import functools

import jax
import jax.numpy as jnp
from jax import lax
from jax.experimental import pallas as pl
from jax.experimental.pallas import tpu as pltpu

LN_EPS = 1e-5  # nn.LayerNorm default eps


def _round_up(x, m):
    return ((x + m - 1) // m) * m


def _vmem_limit_bytes():
    """Generation-aware scoped-VMEM limit (~3/4 of physical, capped)."""
    phys = 64 << 20  # safe default (v7x physical per-TC VMEM)
    try:
        info = pltpu.get_tpu_info()
        cap = getattr(info, "vmem_capacity_bytes", None)
        if cap:
            phys = int(cap)
    except Exception:
        pass
    return int(min(phys * 3 // 4, 100 << 20))


def _pick_tile_rows(bs, d, v_in, v_poi, desired, vmem_limit, fuse_outputs):
    """Largest row-tile (multiple of 8) that fits the VMEM budget, preferring
    an even grid count >= 4 so v7x megacore keeps both TCs pipelined."""
    d_pad = _round_up(d, 128)
    out_lanes = _round_up(5 * d, 128) if fuse_outputs else 5 * d_pad
    bytes_per_row = (
        2 * out_lanes * 4          # double-buffered output stream(s)
        + 2 * 128 * 4              # (TM, 3) packed scalar stream, lane-padded, x2 bufs
        + (v_in + v_poi) * 4       # (TM, V) one-hot intermediates (live f32 values)
        + 8 * d_pad * 4            # misc (TM, D) temporaries / spill slack
    )
    table_bytes = (v_in * 2 * d + v_poi * d) * 4
    # Constant index_map does NOT prevent double-buffering of the tables /
    # vector block, so charge 2x here instead of relying on pl.Buffered(1).
    fixed = 2 * table_bytes + 2 * 6 * d_pad * 4
    budget = int(vmem_limit * 0.75) - fixed
    cap = max(8, (max(budget, 0) // bytes_per_row) // 8 * 8)
    tm = max(8, min(desired, cap, _round_up(bs, 8)) // 8 * 8)
    # v7x megacore: prefer an even number of grid steps >= 4 (>= 2 per TC)
    # so each core still gets prefetch/writeback overlap.
    if bs >= 4 * 8:
        steps = pl.cdiv(bs, tm)
        if steps < 4 or steps % 2:
            for cand in range(tm, 7, -8):
                s = pl.cdiv(bs, cand)
                if s >= 4 and s % 2 == 0:
                    tm = cand
                    break
    return tm


def _joint_embedding_kernel(scal_ref, vec_ref, ssp_tab_ref, poi_tab_ref,
                            *out_refs, div, seq_len, tile_rows, emb_dim,
                            fuse_outputs):
    vecs = vec_ref[...]                       # (6, D) f32 parameter/constant block
    inv_denom = vecs[0:1, :]
    phase = vecs[1:2, :]
    w_t = vecs[2:3, :]
    b_t = vecs[3:4, :]
    gamma = vecs[4:5, :]
    beta = vecs[5:6, :]

    def layernorm(x):
        # Two-pass stats kept for nn.LayerNorm numerical parity; the kernel is
        # write-bound so the extra XLU reduction is hidden (see perf review).
        mu = jnp.mean(x, axis=-1, keepdims=True)
        var = jnp.mean(jnp.square(x - mu), axis=-1, keepdims=True)
        return (x - mu) * lax.rsqrt(var + LN_EPS) * gamma + beta

    scal = scal_ref[...]                      # (TM, 3) packed [time, s_idx, poi_idx]
    t_col = scal[:, 0:1]
    s_idx = scal[:, 1:2].astype(jnp.int32)
    p_idx = scal[:, 2:3].astype(jnp.int32)

    # --- attention_position: sin(pos * 10000**(-2d/D) + phase) -------------
    # NOTE: the exponent 2*d/D per column deliberately matches TULHOR's
    # attention_position (d = 2*arange(D)/D), NOT the canonical 2*floor(d/2)/D.
    # phase is 0 on even columns, pi/2 on odd ones: sin(x+pi/2) == cos(x).
    row0 = pl.program_id(0) * tile_rows
    row = row0 + lax.broadcasted_iota(jnp.int32, (tile_rows, 1), 0)
    pos = (row % seq_len).astype(jnp.float32)                    # (TM, 1)
    pos_n = layernorm(jnp.sin(pos * inv_denom + phase))

    # --- TemporalEncoding: sqrt(1/D) * cos(t * w + b) -----------------------
    time_n = layernorm(div * jnp.cos(t_col * w_t + b_t))

    # --- fused embedding gathers: one-hot x VMEM-resident table on the MXU
    #     (MXU is otherwise idle; HIGHEST precision keeps the gather exact) --
    # NOTE: out-of-range indices (>= padded vocab) yield an all-zero one-hot
    # row -> zero embedding, where torch's nn.Embedding would raise.
    dot = functools.partial(jnp.dot, preferred_element_type=jnp.float32,
                            precision=lax.Precision.HIGHEST)

    def one_hot(idx, width):                                     # (TM, width) f32
        cols = lax.broadcasted_iota(jnp.int32, (tile_rows, width), 1)
        return (idx == cols).astype(jnp.float32)

    oh_in = one_hot(s_idx, ssp_tab_ref.shape[0])    # shared: s_emb & spatial_emb
    oh_poi = one_hot(p_idx, poi_tab_ref.shape[0])

    ssp = dot(oh_in, ssp_tab_ref[...])              # (TM, 2D): [s_emb | spatial_emb]
    s_n = layernorm(ssp[:, :emb_dim])
    sp_n = layernorm(ssp[:, emb_dim:])
    poi_n = layernorm(dot(oh_poi, poi_tab_ref[...]))

    if fuse_outputs:
        # Single lane-dense (TM, 5*D) slab -> one wide store / one output DMA stream.
        out = out_refs[0]
        out[...] = jnp.concatenate([pos_n, time_n, s_n, poi_n, sp_n],
                                   axis=-1).astype(out.dtype)
    else:
        pos_o, time_o, s_o, poi_o, sp_o = out_refs
        pos_o[...] = pos_n.astype(pos_o.dtype)
        time_o[...] = time_n.astype(time_o.dtype)
        s_o[...] = s_n.astype(s_o.dtype)
        poi_o[...] = poi_n.astype(poi_o.dtype)
        sp_o[...] = sp_n.astype(sp_o.dtype)


def joint_embedding_forward(params, input_tensor, time_input, poi_input,
                            *, tile_rows=1024, out_dtype=jnp.float32):
    """Forward pass of JointEmbedding.

    out_dtype: defaults to f32 for exact nn.Module parity.  STRONGLY
    RECOMMENDED for production: jnp.bfloat16 — the kernel is HBM-write bound
    and LN math stays f32 (cast only on the final store), so bf16 halves the
    dominant traffic at negligible accuracy cost.
    """
    B, S = input_tensor.shape
    D = params["gamma"].shape[0]
    BS = B * S
    fuse_outputs = (D % 128) != 0   # lane-dense fused slab when D is narrow

    # Pad vocab dims to a shared multiple of 128 so (a) one one-hot serves both
    # tables indexed by input_tensor and (b) the MXU contraction is lane-aligned.
    v_in = _round_up(max(params["s_emb"].shape[0],
                         params["spatial_emb"].shape[0]), 128)
    v_poi = _round_up(params["poi_emb"].shape[0], 128)

    def pad_rows(tab, v):
        return jnp.pad(tab.astype(jnp.float32), ((0, v - tab.shape[0]), (0, 0)))

    # s_emb / spatial_emb share the index stream -> concatenate along features
    # so the shared one-hot LHS streams through the MXU once.
    ssp_tab = jnp.concatenate([pad_rows(params["s_emb"], v_in),
                               pad_rows(params["spatial_emb"], v_in)], axis=1)
    poi_tab = pad_rows(params["poi_emb"], v_poi)

    vmem_limit = _vmem_limit_bytes()
    table_bytes = (v_in * 2 * D + v_poi * D) * 4
    assert 2 * table_bytes <= vmem_limit // 2, \
        "embedding tables too large to keep VMEM-resident"
    # TODO(synk): for large vocabs (tables beyond the VMEM budget) switch to a
    # scalar-prefetch (PrefetchScalarGridSpec + pl.Element row-gather) variant.

    # Packed per-row scalar stream: [time, s_idx, poi_idx] as f32 (indices are
    # exact in f32 for any realistic vocab size < 2^24).
    scalars = jnp.stack([time_input.astype(jnp.float32).reshape(BS),
                         input_tensor.astype(jnp.float32).reshape(BS),
                         poi_input.astype(jnp.float32).reshape(BS)], axis=-1)

    # Packed per-feature vectors (constant index_map -> loaded once):
    # [inv_denom, phase, time_w, time_b, gamma, beta]
    d_idx = jnp.arange(D, dtype=jnp.float32)
    inv_denom = 1.0 / (10000.0 ** (2.0 * d_idx / D))          # multiply, not divide
    phase = jnp.where(jnp.arange(D) % 2 == 0, 0.0, math.pi / 2.0).astype(jnp.float32)
    vecs = jnp.stack([inv_denom, phase,
                      params["time_w"].astype(jnp.float32),
                      params["time_b"].astype(jnp.float32),
                      params["gamma"].astype(jnp.float32),
                      params["beta"].astype(jnp.float32)], axis=0)   # (6, D)

    div = math.sqrt(1.0 / D)
    TM = _pick_tile_rows(BS, D, v_in, v_poi, tile_rows, vmem_limit, fuse_outputs)
    grid = (pl.cdiv(BS, TM),)   # edge block (if any) is masked by Pallas

    in_specs = [pl.BlockSpec((TM, 3), lambda i: (i, 0)),
                pl.BlockSpec((6, D), lambda i: (0, 0)),
                pl.BlockSpec((v_in, 2 * D), lambda i: (0, 0)),
                pl.BlockSpec((v_poi, D), lambda i: (0, 0))]

    if fuse_outputs:
        out_shape = jax.ShapeDtypeStruct((BS, 5 * D), out_dtype)
        out_specs = pl.BlockSpec((TM, 5 * D), lambda i: (i, 0))
    else:
        out_shape = tuple(jax.ShapeDtypeStruct((BS, D), out_dtype) for _ in range(5))
        out_specs = tuple(pl.BlockSpec((TM, D), lambda i: (i, 0)) for _ in range(5))

    outs = pl.pallas_call(
        functools.partial(_joint_embedding_kernel, div=div, seq_len=S,
                          tile_rows=TM, emb_dim=D, fuse_outputs=fuse_outputs),
        out_shape=out_shape,
        grid_spec=pltpu.PrefetchScalarGridSpec(
            num_scalar_prefetch=0,
            grid=grid,
            in_specs=in_specs,
            out_specs=out_specs,
        ),
        compiler_params=pltpu.CompilerParams(
            dimension_semantics=("parallel",),
            vmem_limit_bytes=vmem_limit),
    )(scalars, vecs, ssp_tab, poi_tab)

    if fuse_outputs:
        chunks = [outs[:, k * D:(k + 1) * D].reshape(B, S, D) for k in range(5)]
    else:
        chunks = [o.reshape(B, S, D) for o in outs]
    pos_n, time_n, s_n, poi_n, sp_n = chunks
    # TODO(synk): LN(PE) is batch-invariant; it could be computed for S rows
    # only if the downstream contract accepted a broadcast (it must be
    # materialized here to match the module's returned tensors).
    # Same nesting as the PyTorch module's return value.
    return ((pos_n, time_n, s_n, poi_n), sp_n)


def init_params(key, vocab_size, size, poi_size, s_vocab):
    """Deterministic synthetic parameter init (shapes follow __init__)."""
    k1, k2, k3 = jax.random.split(key, 3)
    # s_emb: pretrained word2vec vectors concatenated with 5 zero rows.
    s_vecs = jax.random.normal(k1, (s_vocab, size), jnp.float32) * 0.1
    s_emb = jnp.concatenate([s_vecs, jnp.zeros((5, size), jnp.float32)], axis=0)
    spatial_emb = jax.random.normal(k2, (vocab_size, size), jnp.float32)
    poi_emb = jax.random.normal(k3, (poi_size, size), jnp.float32)
    # TemporalEncoding params
    time_w = (1.0 / (10.0 ** jnp.linspace(0.0, 9.0, size))).astype(jnp.float32)
    time_b = jnp.zeros((size,), jnp.float32)
    # LayerNorm params (default init)
    gamma = jnp.ones((size,), jnp.float32)
    beta = jnp.zeros((size,), jnp.float32)
    # TODO(synk): self.mlp (nn.Linear(size+64, size)) is defined but never used
    # in forward(), so it is intentionally omitted.
    return dict(s_emb=s_emb, spatial_emb=spatial_emb, poi_emb=poi_emb,
                time_w=time_w, time_b=time_b, gamma=gamma, beta=beta)


if __name__ == "__main__":
    key = jax.random.PRNGKey(0)
    B, S, D = 2, 8, 32
    s_vocab = 40            # word2vec rows; table gets +5 zero rows -> 45
    vocab_size = 50         # spatial_emb vocab (>= s_vocab + 5)
    poi_size = 30

    kp, ki, kt, kpoi = jax.random.split(key, 4)
    params = init_params(kp, vocab_size, D, poi_size, s_vocab)

    input_tensor = jax.random.randint(ki, (B, S), 0, s_vocab + 5, dtype=jnp.int32)
    time_input = jax.random.uniform(kt, (B, S), jnp.float32, 0.0, 100.0)
    poi_input = jax.random.randint(kpoi, (B, S), 0, poi_size, dtype=jnp.int32)

    (pos_n, time_n, s_n, poi_n), sp_n = joint_embedding_forward(
        params, input_tensor, time_input, poi_input)
    jax.block_until_ready((pos_n, time_n, s_n, poi_n, sp_n))
    print("KERNEL_OK")
</pallas_src>

<mosaic_0001>
module attributes {stable_mosaic.version = 11 : i64} {
  func.func @_joint_embedding_kernel(%arg0: i32, %arg1: memref<16x3xf32, #tpu.memory_space<vmem>>, %arg2: memref<6x32xf32, #tpu.memory_space<vmem>>, %arg3: memref<128x64xf32, #tpu.memory_space<vmem>>, %arg4: memref<128x32xf32, #tpu.memory_space<vmem>>, %arg5: memref<16x160xf32, #tpu.memory_space<vmem>>) attributes {dimension_semantics = [#tpu.dimension_semantics<parallel>], iteration_bounds = array<i64: 1>, scalar_prefetch = 0 : i64, scratch_operands = 0 : i64, tpu.core_type = #tpu.core_type<tc>, window_params = [{transform_indices = @transform_0, window_bounds = array<i64: 16, 3>}, {pipeline_mode = #tpu.pipeline_mode<synchronous>, transform_indices = @transform_1, window_bounds = array<i64: 6, 32>}, {pipeline_mode = #tpu.pipeline_mode<synchronous>, transform_indices = @transform_2, window_bounds = array<i64: 128, 64>}, {pipeline_mode = #tpu.pipeline_mode<synchronous>, transform_indices = @transform_3, window_bounds = array<i64: 128, 32>}, {transform_indices = @transform_4, window_bounds = array<i64: 16, 160>}]} {
    %c0 = arith.constant 0 : index
    %c0_0 = arith.constant 0 : index
    %0 = vector.load %arg2[%c0, %c0_0] : memref<6x32xf32, #tpu.memory_space<vmem>>, vector<6x32xf32>
    %1 = vector.extract_strided_slice %0 {offsets = [0, 0], sizes = [1, 32], strides = [1, 1]} : vector<6x32xf32> to vector<1x32xf32>
    %2 = vector.extract_strided_slice %0 {offsets = [1, 0], sizes = [1, 32], strides = [1, 1]} : vector<6x32xf32> to vector<1x32xf32>
    %3 = vector.extract_strided_slice %0 {offsets = [2, 0], sizes = [1, 32], strides = [1, 1]} : vector<6x32xf32> to vector<1x32xf32>
    %4 = vector.extract_strided_slice %0 {offsets = [3, 0], sizes = [1, 32], strides = [1, 1]} : vector<6x32xf32> to vector<1x32xf32>
    %5 = vector.extract_strided_slice %0 {offsets = [4, 0], sizes = [1, 32], strides = [1, 1]} : vector<6x32xf32> to vector<1x32xf32>
    %6 = vector.extract_strided_slice %0 {offsets = [5, 0], sizes = [1, 32], strides = [1, 1]} : vector<6x32xf32> to vector<1x32xf32>
    %c0_1 = arith.constant 0 : index
    %c0_2 = arith.constant 0 : index
    %7 = vector.load %arg1[%c0_1, %c0_2] : memref<16x3xf32, #tpu.memory_space<vmem>>, vector<16x3xf32>
    %8 = vector.extract_strided_slice %7 {offsets = [0, 0], sizes = [16, 1], strides = [1, 1]} : vector<16x3xf32> to vector<16x1xf32>
    %9 = vector.extract_strided_slice %7 {offsets = [0, 1], sizes = [16, 1], strides = [1, 1]} : vector<16x3xf32> to vector<16x1xf32>
    %10 = arith.fptosi %9 : vector<16x1xf32> to vector<16x1xi32>
    %11 = vector.extract_strided_slice %7 {offsets = [0, 2], sizes = [16, 1], strides = [1, 1]} : vector<16x3xf32> to vector<16x1xf32>
    %12 = arith.fptosi %11 : vector<16x1xf32> to vector<16x1xi32>
    %c16_i32 = arith.constant 16 : i32
    %13 = arith.muli %arg0, %c16_i32 : i32
    %14 = tpu.iota {dimensions = array<i32: 0>} : vector<16x1xi32>
    %15 = vector.broadcast %13 : i32 to vector<16x1xi32>
    %16 = arith.addi %15, %14 : vector<16x1xi32>
    %c8_i32 = arith.constant 8 : i32
    %c0_i32 = arith.constant 0 : i32
    %17 = arith.cmpi eq, %c8_i32, %c0_i32 : i32
    %c1_i32 = arith.constant 1 : i32
    %18 = arith.select %17, %c1_i32, %c8_i32 : i32
    %19 = vector.broadcast %18 : i32 to vector<16x1xi32>
    %20 = arith.remsi %16, %19 : vector<16x1xi32>
    %c0_i32_3 = arith.constant 0 : i32
    %21 = vector.broadcast %c0_i32_3 : i32 to vector<16x1xi32>
    %22 = arith.cmpi ne, %20, %21 : vector<16x1xi32>
    %c0_i32_4 = arith.constant 0 : i32
    %23 = vector.broadcast %c0_i32_4 : i32 to vector<16x1xi32>
    %24 = arith.cmpi slt, %20, %23 : vector<16x1xi32>
    %c0_i32_5 = arith.constant 0 : i32
    %25 = arith.cmpi slt, %18, %c0_i32_5 : i32
    %26 = vector.broadcast %25 : i1 to vector<16x1xi1>
    %27 = vector.broadcast %26 : vector<16x1xi1> to vector<16x1xi1>
    %28 = arith.xori %24, %27 : vector<16x1xi1>
    %29 = arith.andi %28, %22 : vector<16x1xi1>
    %30 = vector.broadcast %18 : i32 to vector<16x1xi32>
    %31 = arith.addi %20, %30 : vector<16x1xi32>
    %32 = arith.select %29, %31, %20 : vector<16x1xi1>, vector<16x1xi32>
    %33 = arith.sitofp %32 : vector<16x1xi32> to vector<16x1xf32>
    %34 = vector.broadcast %33 : vector<16x1xf32> to vector<16x32xf32>
    %35 = vector.broadcast %1 : vector<1x32xf32> to vector<16x32xf32>
    %36 = arith.mulf %34, %35 : vector<16x32xf32>
    %37 = vector.broadcast %2 : vector<1x32xf32> to vector<16x32xf32>
    %38 = arith.addf %36, %37 : vector<16x32xf32>
    %39 = math.sin %38 : vector<16x32xf32>
    %cst = arith.constant dense<0.000000e+00> : vector<16xf32>
    %40 = vector.multi_reduction <add>, %39, %cst [1] : vector<16x32xf32> to vector<16xf32>
    %41 = vector.shape_cast %40 : vector<16xf32> to vector<16x1xf32>
    %cst_6 = arith.constant 3.200000e+01 : f32
    %42 = vector.broadcast %cst_6 : f32 to vector<16x1xf32>
    %43 = arith.divf %41, %42 : vector<16x1xf32>
    %44 = vector.broadcast %43 : vector<16x1xf32> to vector<16x32xf32>
    %45 = arith.subf %39, %44 : vector<16x32xf32>
    %46 = arith.mulf %45, %45 : vector<16x32xf32>
    %cst_7 = arith.constant dense<0.000000e+00> : vector<16xf32>
    %47 = vector.multi_reduction <add>, %46, %cst_7 [1] : vector<16x32xf32> to vector<16xf32>
    %48 = vector.shape_cast %47 : vector<16xf32> to vector<16x1xf32>
    %cst_8 = arith.constant 3.200000e+01 : f32
    %49 = vector.broadcast %cst_8 : f32 to vector<16x1xf32>
    %50 = arith.divf %48, %49 : vector<16x1xf32>
    %51 = vector.broadcast %43 : vector<16x1xf32> to vector<16x32xf32>
    %52 = arith.subf %39, %51 : vector<16x32xf32>
    %cst_9 = arith.constant 9.99999974E-6 : f32
    %53 = vector.broadcast %cst_9 : f32 to vector<16x1xf32>
    %54 = arith.addf %50, %53 : vector<16x1xf32>
    %55 = math.rsqrt %54 : vector<16x1xf32>
    %56 = vector.broadcast %55 : vector<16x1xf32> to vector<16x32xf32>
    %57 = arith.mulf %52, %56 : vector<16x32xf32>
    %58 = vector.broadcast %5 : vector<1x32xf32> to vector<16x32xf32>
    %59 = arith.mulf %57, %58 : vector<16x32xf32>
    %60 = vector.broadcast %6 : vector<1x32xf32> to vector<16x32xf32>
    %61 = arith.addf %59, %60 : vector<16x32xf32>
    %62 = vector.broadcast %8 : vector<16x1xf32> to vector<16x32xf32>
    %63 = vector.broadcast %3 : vector<1x32xf32> to vector<16x32xf32>
    %64 = arith.mulf %62, %63 : vector<16x32xf32>
    %65 = vector.broadcast %4 : vector<1x32xf32> to vector<16x32xf32>
    %66 = arith.addf %64, %65 : vector<16x32xf32>
    %67 = math.cos %66 : vector<16x32xf32>
    %cst_10 = arith.constant 0.176776692 : f32
    %68 = vector.broadcast %cst_10 : f32 to vector<16x32xf32>
    %69 = arith.mulf %68, %67 : vector<16x32xf32>
    %cst_11 = arith.constant dense<0.000000e+00> : vector<16xf32>
    %70 = vector.multi_reduction <add>, %69, %cst_11 [1] : vector<16x32xf32> to vector<16xf32>
    %71 = vector.shape_cast %70 : vector<16xf32> to vector<16x1xf32>
    %cst_12 = arith.constant 3.200000e+01 : f32
    %72 = vector.broadcast %cst_12 : f32 to vector<16x1xf32>
    %73 = arith.divf %71, %72 : vector<16x1xf32>
    %74 = vector.broadcast %73 : vector<16x1xf32> to vector<16x32xf32>
    %75 = arith.subf %69, %74 : vector<16x32xf32>
    %76 = arith.mulf %75, %75 : vector<16x32xf32>
    %cst_13 = arith.constant dense<0.000000e+00> : vector<16xf32>
    %77 = vector.multi_reduction <add>, %76, %cst_13 [1] : vector<16x32xf32> to vector<16xf32>
    %78 = vector.shape_cast %77 : vector<16xf32> to vector<16x1xf32>
    %cst_14 = arith.constant 3.200000e+01 : f32
    %79 = vector.broadcast %cst_14 : f32 to vector<16x1xf32>
    %80 = arith.divf %78, %79 : vector<16x1xf32>
    %81 = vector.broadcast %73 : vector<16x1xf32> to vector<16x32xf32>
    %82 = arith.subf %69, %81 : vector<16x32xf32>
    %cst_15 = arith.constant 9.99999974E-6 : f32
    %83 = vector.broadcast %cst_15 : f32 to vector<16x1xf32>
    %84 = arith.addf %80, %83 : vector<16x1xf32>
    %85 = math.rsqrt %84 : vector<16x1xf32>
    %86 = vector.broadcast %85 : vector<16x1xf32> to vector<16x32xf32>
    %87 = arith.mulf %82, %86 : vector<16x32xf32>
    %88 = vector.broadcast %5 : vector<1x32xf32> to vector<16x32xf32>
    %89 = arith.mulf %87, %88 : vector<16x32xf32>
    %90 = vector.broadcast %6 : vector<1x32xf32> to vector<16x32xf32>
    %91 = arith.addf %89, %90 : vector<16x32xf32>
    %92 = tpu.iota {dimensions = array<i32: 1>} : vector<16x128xi32>
    %93 = vector.broadcast %10 : vector<16x1xi32> to vector<16x128xi32>
    %94 = arith.cmpi eq, %93, %92 : vector<16x128xi32>
    %95 = arith.extui %94 : vector<16x128xi1> to vector<16x128xi32>
    %96 = arith.sitofp %95 : vector<16x128xi32> to vector<16x128xf32>
    %97 = tpu.iota {dimensions = array<i32: 1>} : vector<16x128xi32>
    %98 = vector.broadcast %12 : vector<16x1xi32> to vector<16x128xi32>
    %99 = arith.cmpi eq, %98, %97 : vector<16x128xi32>
    %100 = arith.extui %99 : vector<16x128xi1> to vector<16x128xi32>
    %101 = arith.sitofp %100 : vector<16x128xi32> to vector<16x128xf32>
    %c0_16 = arith.constant 0 : index
    %c0_17 = arith.constant 0 : index
    %102 = vector.load %arg3[%c0_16, %c0_17] : memref<128x64xf32, #tpu.memory_space<vmem>>, vector<128x64xf32>
    %cst_18 = arith.constant dense<0.000000e+00> : vector<16x64xf32>
    %103 = tpu.matmul %96, %102, %cst_18 {dimension_numbers = #tpu.dot_dimension_numbers<[1], [0], [0], [1], [0, 0, 1, 1], [], []>, precision = #tpu.contract_precision<fp32>} : vector<16x128xf32>, vector<128x64xf32>, vector<16x64xf32> -> vector<16x64xf32>
    %104 = vector.extract_strided_slice %103 {offsets = [0, 0], sizes = [16, 32], strides = [1, 1]} : vector<16x64xf32> to vector<16x32xf32>
    %cst_19 = arith.constant dense<0.000000e+00> : vector<16xf32>
    %105 = vector.multi_reduction <add>, %104, %cst_19 [1] : vector<16x32xf32> to vector<16xf32>
    %106 = vector.shape_cast %105 : vector<16xf32> to vector<16x1xf32>
    %cst_20 = arith.constant 3.200000e+01 : f32
    %107 = vector.broadcast %cst_20 : f32 to vector<16x1xf32>
    %108 = arith.divf %106, %107 : vector<16x1xf32>
    %109 = vector.broadcast %108 : vector<16x1xf32> to vector<16x32xf32>
    %110 = arith.subf %104, %109 : vector<16x32xf32>
    %111 = arith.mulf %110, %110 : vector<16x32xf32>
    %cst_21 = arith.constant dense<0.000000e+00> : vector<16xf32>
    %112 = vector.multi_reduction <add>, %111, %cst_21 [1] : vector<16x32xf32> to vector<16xf32>
    %113 = vector.shape_cast %112 : vector<16xf32> to vector<16x1xf32>
    %cst_22 = arith.constant 3.200000e+01 : f32
    %114 = vector.broadcast %cst_22 : f32 to vector<16x1xf32>
    %115 = arith.divf %113, %114 : vector<16x1xf32>
    %116 = vector.broadcast %108 : vector<16x1xf32> to vector<16x32xf32>
    %117 = arith.subf %104, %116 : vector<16x32xf32>
    %cst_23 = arith.constant 9.99999974E-6 : f32
    %118 = vector.broadcast %cst_23 : f32 to vector<16x1xf32>
    %119 = arith.addf %115, %118 : vector<16x1xf32>
    %120 = math.rsqrt %119 : vector<16x1xf32>
    %121 = vector.broadcast %120 : vector<16x1xf32> to vector<16x32xf32>
    %122 = arith.mulf %117, %121 : vector<16x32xf32>
    %123 = vector.broadcast %5 : vector<1x32xf32> to vector<16x32xf32>
    %124 = arith.mulf %122, %123 : vector<16x32xf32>
    %125 = vector.broadcast %6 : vector<1x32xf32> to vector<16x32xf32>
    %126 = arith.addf %124, %125 : vector<16x32xf32>
    %127 = vector.extract_strided_slice %103 {offsets = [0, 32], sizes = [16, 32], strides = [1, 1]} : vector<16x64xf32> to vector<16x32xf32>
    %cst_24 = arith.constant dense<0.000000e+00> : vector<16xf32>
    %128 = vector.multi_reduction <add>, %127, %cst_24 [1] : vector<16x32xf32> to vector<16xf32>
    %129 = vector.shape_cast %128 : vector<16xf32> to vector<16x1xf32>
    %cst_25 = arith.constant 3.200000e+01 : f32
    %130 = vector.broadcast %cst_25 : f32 to vector<16x1xf32>
    %131 = arith.divf %129, %130 : vector<16x1xf32>
    %132 = vector.broadcast %131 : vector<16x1xf32> to vector<16x32xf32>
    %133 = arith.subf %127, %132 : vector<16x32xf32>
    %134 = arith.mulf %133, %133 : vector<16x32xf32>
    %cst_26 = arith.constant dense<0.000000e+00> : vector<16xf32>
    %135 = vector.multi_reduction <add>, %134, %cst_26 [1] : vector<16x32xf32> to vector<16xf32>
    %136 = vector.shape_cast %135 : vector<16xf32> to vector<16x1xf32>
    %cst_27 = arith.constant 3.200000e+01 : f32
    %137 = vector.broadcast %cst_27 : f32 to vector<16x1xf32>
    %138 = arith.divf %136, %137 : vector<16x1xf32>
    %139 = vector.broadcast %131 : vector<16x1xf32> to vector<16x32xf32>
    %140 = arith.subf %127, %139 : vector<16x32xf32>
    %cst_28 = arith.constant 9.99999974E-6 : f32
    %141 = vector.broadcast %cst_28 : f32 to vector<16x1xf32>
    %142 = arith.addf %138, %141 : vector<16x1xf32>
    %143 = math.rsqrt %142 : vector<16x1xf32>
    %144 = vector.broadcast %143 : vector<16x1xf32> to vector<16x32xf32>
    %145 = arith.mulf %140, %144 : vector<16x32xf32>
    %146 = vector.broadcast %5 : vector<1x32xf32> to vector<16x32xf32>
    %147 = arith.mulf %145, %146 : vector<16x32xf32>
    %148 = vector.broadcast %6 : vector<1x32xf32> to vector<16x32xf32>
    %149 = arith.addf %147, %148 : vector<16x32xf32>
    %c0_29 = arith.constant 0 : index
    %c0_30 = arith.constant 0 : index
    %150 = vector.load %arg4[%c0_29, %c0_30] : memref<128x32xf32, #tpu.memory_space<vmem>>, vector<128x32xf32>
    %cst_31 = arith.constant dense<0.000000e+00> : vector<16x32xf32>
    %151 = tpu.matmul %101, %150, %cst_31 {dimension_numbers = #tpu.dot_dimension_numbers<[1], [0], [0], [1], [0, 0, 1, 1], [], []>, precision = #tpu.contract_precision<fp32>} : vector<16x128xf32>, vector<128x32xf32>, vector<16x32xf32> -> vector<16x32xf32>
    %cst_32 = arith.constant dense<0.000000e+00> : vector<16xf32>
    %152 = vector.multi_reduction <add>, %151, %cst_32 [1] : vector<16x32xf32> to vector<16xf32>
    %153 = vector.shape_cast %152 : vector<16xf32> to vector<16x1xf32>
    %cst_33 = arith.constant 3.200000e+01 : f32
    %154 = vector.broadcast %cst_33 : f32 to vector<16x1xf32>
    %155 = arith.divf %153, %154 : vector<16x1xf32>
    %156 = vector.broadcast %155 : vector<16x1xf32> to vector<16x32xf32>
    %157 = arith.subf %151, %156 : vector<16x32xf32>
    %158 = arith.mulf %157, %157 : vector<16x32xf32>
    %cst_34 = arith.constant dense<0.000000e+00> : vector<16xf32>
    %159 = vector.multi_reduction <add>, %158, %cst_34 [1] : vector<16x32xf32> to vector<16xf32>
    %160 = vector.shape_cast %159 : vector<16xf32> to vector<16x1xf32>
    %cst_35 = arith.constant 3.200000e+01 : f32
    %161 = vector.broadcast %cst_35 : f32 to vector<16x1xf32>
    %162 = arith.divf %160, %161 : vector<16x1xf32>
    %163 = vector.broadcast %155 : vector<16x1xf32> to vector<16x32xf32>
    %164 = arith.subf %151, %163 : vector<16x32xf32>
    %cst_36 = arith.constant 9.99999974E-6 : f32
    %165 = vector.broadcast %cst_36 : f32 to vector<16x1xf32>
    %166 = arith.addf %162, %165 : vector<16x1xf32>
    %167 = math.rsqrt %166 : vector<16x1xf32>
    %168 = vector.broadcast %167 : vector<16x1xf32> to vector<16x32xf32>
    %169 = arith.mulf %164, %168 : vector<16x32xf32>
    %170 = vector.broadcast %5 : vector<1x32xf32> to vector<16x32xf32>
    %171 = arith.mulf %169, %170 : vector<16x32xf32>
    %172 = vector.broadcast %6 : vector<1x32xf32> to vector<16x32xf32>
    %173 = arith.addf %171, %172 : vector<16x32xf32>
    %174 = tpu.concatenate %61, %91, %126, %173, %149 in 1 : vector<16x32xf32>, vector<16x32xf32>, vector<16x32xf32>, vector<16x32xf32>, vector<16x32xf32> -> vector<16x160xf32>
    %c0_37 = arith.constant 0 : index
    %c0_38 = arith.constant 0 : index
    %175 = vector.load %arg5[%c0_37, %c0_38] : memref<16x160xf32, #tpu.memory_space<vmem>>, vector<16x160xf32>
    tpu.vector_store %arg5[%c0_37, %c0_38], %174 {strides = array<i32>} : memref<16x160xf32, #tpu.memory_space<vmem>>, vector<16x160xf32>,
    return
  }
  func.func @transform_0(%arg0: i32) -> (i32, i32) {
    %c0_i32 = arith.constant 0 : i32
    %c0_i32_0 = arith.constant 0 : i32
    return %arg0, %c0_i32 : i32, i32
  }
  func.func @transform_1(%arg0: i32) -> (i32, i32) {
    %c0_i32 = arith.constant 0 : i32
    %c0_i32_0 = arith.constant 0 : i32
    %c0_i32_1 = arith.constant 0 : i32
    return %c0_i32, %c0_i32_0 : i32, i32
  }
  func.func @transform_2(%arg0: i32) -> (i32, i32) {
    %c0_i32 = arith.constant 0 : i32
    %c0_i32_0 = arith.constant 0 : i32
    %c0_i32_1 = arith.constant 0 : i32
    return %c0_i32, %c0_i32_0 : i32, i32
  }
  func.func @transform_3(%arg0: i32) -> (i32, i32) {
    %c0_i32 = arith.constant 0 : i32
    %c0_i32_0 = arith.constant 0 : i32
    %c0_i32_1 = arith.constant 0 : i32
    return %c0_i32, %c0_i32_0 : i32, i32
  }
  func.func @transform_4(%arg0: i32) -> (i32, i32) {
    %c0_i32 = arith.constant 0 : i32
    %c0_i32_0 = arith.constant 0 : i32
    return %arg0, %c0_i32 : i32, i32
  }
}

</mosaic_0001>

<llo_original>
// kernel: tpu_custom_call.1
$region0: #{tpu_custom_call.1}
  #allocation0 [shape = 'u32[]', space=smem, size = 0x4, offset = 0x4, fixed_abs, tag = 'smem constant byte address 0x4 - core index']
  #allocation1 [shape = 'u32[144,128]{1,0:T(1,128)}', space=vmem, size = 0x12000, scoped, tag = 'internal scratch']
  %s0 = inlined_call_operand.vmem [shape: f32[16,3], index: 0, kind: input, shape index: {}]
  %s1 = inlined_call_operand.vmem [shape: f32[6,32], index: 1, kind: input, shape index: {}]
  %s2 = inlined_call_operand.vmem [shape: f32[128,64], index: 2, kind: input, shape index: {}]
  %s3 = inlined_call_operand.vmem [shape: f32[128,32], index: 3, kind: input, shape index: {}]
  %s4 = inlined_call_operand.hbm [shape: f32[16,160], index: 4, kind: output, shape index: {}]
  %s5 = sld [smem:[#allocation0]]
  $region26: #{tpu_custom_call.1} parent=0
    _
  %s7 = ssub.s32 1, %s5
  %s8 = scalar_select 0, %s7, %s5
  $region1: #{tpu_custom_call.1} parent=0
    #allocation2 [shape = 'u8[16384]{0}', space=vmem, size = 0x4000, scoped, tag = 'output window, operand 0, single buffered']
    #allocation3 [shape = 's32[1]{0}', space=sflag, size = 0x4, scoped, tag = 'scoped memory for tpu_custom_call.1']
    %9 = vsyncpa [#allocation3], 0
    // Predicated region
    $region2: #{tpu_custom_call.1} parent=1 // pred_check
      _
    $region3: #{tpu_custom_call.1} parent=1 // pred_check_branch
      %11 = sbr.rel (0) target = $region5
    $region4: #{tpu_custom_call.1} parent=1 // pred_region
      _
    $region5: #{tpu_custom_call.1} parent=1 // pred_fallthru
      _
    // Predicated region
    $region6: #{tpu_custom_call.1} parent=1 // pred_check
      _
    $region7: #{tpu_custom_call.1} parent=1 // pred_check_branch
      %13 = sbr.rel (0) target = $region9
    $region8: #{tpu_custom_call.1} parent=1 // pred_region
      _
    $region9: #{tpu_custom_call.1} parent=1 // pred_fallthru
      _
    // Predicated region
    $region10: #{tpu_custom_call.1} parent=1 // pred_check
      _
    $region11: #{tpu_custom_call.1} parent=1 // pred_check_branch
      %15 = sbr.rel (0) target = $region13
    $region12: #{tpu_custom_call.1} parent=1 // pred_region
      _
    $region13: #{tpu_custom_call.1} parent=1 // pred_fallthru
      _
    // Predicated region
    $region14: #{tpu_custom_call.1} parent=1 // pred_check
      _
    $region15: #{tpu_custom_call.1} parent=1 // pred_check_branch
      %17 = sbr.rel (0) target = $region17
    $region16: #{tpu_custom_call.1} parent=1 // pred_region
      _
    $region17: #{tpu_custom_call.1} parent=1 // pred_fallthru
      _
    %v18 = vld [vmem:[%s1] sm:$0x3f]
    %v19 = vld [vmem:[%s0] sm:$0xff]
    %v20 = vld [vmem:[%s0 + $0x8] sm:$0xff]
    %v21 = vcvt.f32.s32.to.zero.pseudo %v19
    %v22 = vcvt.f32.s32.to.zero.pseudo %v20
    %s23 = smul.u32 0, 16
    %v24 = vlaneseq
    %v25 = vshrl.u32 %v24, 7
    %v26 = vadd.s32 %v25, 8
    %v27 = vstv %s23
    %v28 = vadd.s32 %v27, %v25
    %v29 = vadd.s32 %v27, %v26
    %vm30 = vcmp.lt.s32.totalorder %v28, 0
    %v31 = vsub.s32 0, %v28
    %v32 = vsel %vm30, %v31, %v28
    %v33 = vshrl.u32 %v32, 3
    %v34 = vand.u32 %v32, 7
    %v35 = vsub.s32 0, %v34
    %v36 = vsel %vm30, %v35, %v34
    %vm37 = vcmp.lt.s32.totalorder %v29, 0
    %v38 = vsub.s32 0, %v29
    %v39 = vsel %vm37, %v38, %v29
    %v40 = vshrl.u32 %v39, 3
    %v41 = vand.u32 %v39, 7
    %v42 = vsub.s32 0, %v41
    %v43 = vsel %vm37, %v42, %v41
    %vm44 = vcmp.ne.s32.totalorder %v36, 0
    %vm45 = vcmp.ne.s32.totalorder %v43, 0
    %vm46 = vcmp.lt.s32.totalorder %v36, 0
    %vm47 = vcmp.lt.s32.totalorder %v43, 0
    %vm48 = vmand %vm46, %vm44
    %vm49 = vmand %vm47, %vm45
    %v50 = vadd.s32 %v36, 8
    %v51 = vadd.s32 %v43, 8
    %v52 = vsel %vm48, %v50, %v36
    %v53 = vsel %vm49, %v51, %v43
    %v54 = vcvt.s32.f32 %v52
    %v55 = vcvt.s32.f32 %v53
    %v56 = vlaneseq
    %v57 = vshrl.u32 %v56, 7
    %v58 = vsub.s32 0, %v57
    %v59 = vrot.slane %v18, %v58
    %v60 = vmul.f32 %v54, %v59
    %v61 = vmul.f32 %v55, %v59
    %v62 = vlaneseq
    %v63 = vshrl.u32 %v62, 7
    %v64 = vsub.s32 1, %v63
    %v65 = vrot.slane %v18, %v64
    %v66 = vadd.f32 %v60, %v65
    %v67 = vadd.f32 %v61, %v65
    %v68 = vand.u32 2147483647, %v66
    %vm69 = vcmp.le.f32.partialorder %v68, 0.7853982
    %vm70 = vcmp.lt.s32.totalorder %v66, 0
    %v71 = vand.u32 %v66, 2139095040
    %v72 = vshrl.u32 %v71, 23
    %v73 = vsub.s32 %v72, 127
    %v74 = vand.u32 2147483647, %v66
    %v75 = vand.u32 %v74, 8388607
    %v76 = vor.u32 %v75, 8388608
    %v77 = vsub.s32 0, %v76
    %v78 = vadd.s32 %v73, 1
    %vm79 = vcmp.gt.s32.totalorder %v78, 0
    %v80 = vsel %vm79, %v78, 0
    %v81 = vshrl.u32 %v80, 5
    %v82 = vand.u32 %v80, 31
    %v83 = vsub.s32 32, %v82
    %v84 = vshrl.u32 683565275, %v83
    %v85 = vshll.u32 683565275, %v82
    %v86 = vshrl.u32 2475754826, %v83
    %v87 = vor.u32 %v85, %v86
    %v88 = vshll.u32 2475754826, %v82
    %v89 = vshrl.u32 2131351028, %v83
    %v90 = vor.u32 %v88, %v89
    %v91 = vshll.u32 2131351028, %v82
    %v92 = vshrl.u32 2102212464, %v83
    %v93 = vor.u32 %v91, %v92
    %v94 = vshll.u32 2102212464, %v82
    %v95 = vshrl.u32 920167782, %v83
    %v96 = vor.u32 %v94, %v95
    %v97 = vshll.u32 920167782, %v82
    %v98 = vshrl.u32 1326507024, %v83
    %v99 = vor.u32 %v97, %v98
    %vm100 = vcmp.lt.s32.totalorder %v81, 1
    %vm101 = vcmp.lt.s32.totalorder %v81, 2
    %vm102 = vcmp.lt.s32.totalorder %v81, 3
    %vm103 = vcmp.lt.s32.totalorder %v81, 4
    %v104 = vsel %vm100, %v84, %v87
    %v105 = vsel %vm103, %v93, 2102212464
    %v106 = vsel %vm102, %v90, %v105
    %v107 = vsel %vm101, %v104, %v106
    %v108 = vsel %vm100, %v87, %v90
    %v109 = vsel %vm103, %v96, 920167782
    %v110 = vsel %vm102, %v93, %v109
    %v111 = vsel %vm101, %v108, %v110
    %v112 = vsel %vm100, %v90, %v93
    %v113 = vsel %vm103, %v99, 1326507024
    %v114 = vsel %vm102, %v96, %v113
    %v115 = vsel %vm101, %v112, %v114
    %v116 = vshll.u32 %v76, 8
    %v117 = vmul.u32.u64.compose %v116, %v115
    %v118 = vextract.low.u32 %v117
    %v119 = vextract.high.u32 %v117
    %v120 = vmul.u32.u64.compose %v116, %v111
    %v121 = vextract.low.u32 %v120
    %v122 = vextract.high.u32 %v120
    %v123 = vmul.u32 %v116, %v107
    %v124 = vadd.s32 %v119, %v121
    %vm125 = vc.u32 %v119, %v121
    %v126 = vadd.s32 %v122, 1
    %v127 = vsel %vm125, %v126, %v122
    %v128 = vadd.s32 %v123, %v127
    %v129 = vadd.s32 %v128, 536870912
    %v130 = vshrl.u32 %v129, 30
    %v131 = vshll.u32 %v130, 30
    %v132 = vsub.s32 %v128, %v131
    %vm133 = vcmp.lt.s32.totalorder %v132, 0
    %v134 = vsub.s32 0, %v132
    %v135 = vsel %vm133, %v134, %v132
    %v136 = vclz %v135
    %v137 = vsub.s32 %v136, 2
    %vm138 = vcmp.gt.s32.totalorder 0, %v137
    %v139 = vsel %vm138, 0, %v137
    %v140 = vsub.s32 32, %v139
    %v141 = vshll.u32 %v132, %v139
    %v142 = vshrl.u32 %v124, %v140
    %v143 = vor.u32 %v141, %v142
    %v144 = vsub.s32 4294967266, %v139
    %v145 = vadd.s32 %v144, 127
    %v146 = vshll.u32 %v145, 23
    %v147 = vor.u32 4788187, %v146
    %v148 = vand.u32 2147483647, %v147
    %v150 = vcvt.s32.f32 %v143
    %v151 = vmul.f32 %v150, %v148
    %v152 = vxor.u32 %v151, 2147483648
    %v153 = vsel %vm70, %v152, %v151
    %v154 = vsub.s32 4, %v130
    %v155 = vsel %vm70, %v154, %v130
    %v156 = vsel %vm69, %v66, %v153
    %v157 = vsel %vm69, 0, %v155
    %v158 = vcosq.f32.pop %v156
    %v159 = vsinq.f32.pop %v156
    %vm160 = vweird.f32 %v66
    %v161 = vadd.s32 %v157, 3
    %v162 = vand.u32 %v161, 3
    %vm163 = vcmp.lt.s32.totalorder %v162, 2
    %vm164 = vcmp.eq.s32.totalorder %v162, 0
    %v165 = vxor.u32 %v159, 2147483648
    %v166 = vsel %vm164, %v158, %v165
    %vm167 = vcmp.eq.s32.totalorder %v162, 2
    %v168 = vxor.u32 %v158, 2147483648
    %v169 = vsel %vm167, %v168, %v159
    %v170 = vsel %vm163, %v166, %v169
    %v171 = vsel %vm160, nan, %v170
    %v172 = vand.u32 2147483647, %v67
    %vm173 = vcmp.le.f32.partialorder %v172, 0.7853982
    %vm174 = vcmp.lt.s32.totalorder %v67, 0
    %v175 = vand.u32 %v67, 2139095040
    %v176 = vshrl.u32 %v175, 23
    %v177 = vsub.s32 %v176, 127
    %v178 = vand.u32 2147483647, %v67
    %v179 = vand.u32 %v178, 8388607
    %v180 = vor.u32 %v179, 8388608
    %v181 = vsub.s32 0, %v180
    %v182 = vadd.s32 %v177, 1
    %vm183 = vcmp.gt.s32.totalorder %v182, 0
    %v184 = vsel %vm183, %v182, 0
    %v185 = vshrl.u32 %v184, 5
    %v186 = vand.u32 %v184, 31
    %v187 = vsub.s32 32, %v186
    %v188 = vshrl.u32 683565275, %v187
    %v189 = vshll.u32 683565275, %v186
    %v190 = vshrl.u32 2475754826, %v187
    %v191 = vor.u32 %v189, %v190
    %v192 = vshll.u32 2475754826, %v186
    %v193 = vshrl.u32 2131351028, %v187
    %v194 = vor.u32 %v192, %v193
    %v195 = vshll.u32 2131351028, %v186
    %v196 = vshrl.u32 2102212464, %v187
    %v197 = vor.u32 %v195, %v196
    %v198 = vshll.u32 2102212464, %v186
    %v199 = vshrl.u32 920167782, %v187
    %v200 = vor.u32 %v198, %v199
    %v201 = vshll.u32 920167782, %v186
    %v202 = vshrl.u32 1326507024, %v187
    %v203 = vor.u32 %v201, %v202
    %vm204 = vcmp.lt.s32.totalorder %v185, 1
    %vm205 = vcmp.lt.s32.totalorder %v185, 2
    %vm206 = vcmp.lt.s32.totalorder %v185, 3
    %vm207 = vcmp.lt.s32.totalorder %v185, 4
    %v208 = vsel %vm204, %v188, %v191
    %v209 = vsel %vm207, %v197, 2102212464
    %v210 = vsel %vm206, %v194, %v209
    %v211 = vsel %vm205, %v208, %v210
    %v212 = vsel %vm204, %v191, %v194
    %v213 = vsel %vm207, %v200, 920167782
    %v214 = vsel %vm206, %v197, %v213
    %v215 = vsel %vm205, %v212, %v214
    %v216 = vsel %vm204, %v194, %v197
    %v217 = vsel %vm207, %v203, 1326507024
    %v218 = vsel %vm206, %v200, %v217
    %v219 = vsel %vm205, %v216, %v218
    %v220 = vshll.u32 %v180, 8
    %v221 = vmul.u32.u64.compose %v220, %v219
    %v222 = vextract.low.u32 %v221
    %v223 = vextract.high.u32 %v221
    %v224 = vmul.u32.u64.compose %v220, %v215
    %v225 = vextract.low.u32 %v224
    %v226 = vextract.high.u32 %v224
    %v227 = vmul.u32 %v220, %v211
    %v228 = vadd.s32 %v223, %v225
    %vm229 = vc.u32 %v223, %v225
    %v230 = vadd.s32 %v226, 1
    %v231 = vsel %vm229, %v230, %v226
    %v232 = vadd.s32 %v227, %v231
    %v233 = vadd.s32 %v232, 536870912
    %v234 = vshrl.u32 %v233, 30
    %v235 = vshll.u32 %v234, 30
    %v236 = vsub.s32 %v232, %v235
    %vm237 = vcmp.lt.s32.totalorder %v236, 0
    %v238 = vsub.s32 0, %v236
    %v239 = vsel %vm237, %v238, %v236
    %v240 = vclz %v239
    %v241 = vsub.s32 %v240, 2
    %vm242 = vcmp.gt.s32.totalorder 0, %v241
    %v243 = vsel %vm242, 0, %v241
    %v244 = vsub.s32 32, %v243
    %v245 = vshll.u32 %v236, %v243
    %v246 = vshrl.u32 %v228, %v244
    %v247 = vor.u32 %v245, %v246
    %v248 = vsub.s32 4294967266, %v243
    %v249 = vadd.s32 %v248, 127
    %v250 = vshll.u32 %v249, 23
    %v251 = vor.u32 4788187, %v250
    %v252 = vand.u32 2147483647, %v251
    %v254 = vcvt.s32.f32 %v247
    %v255 = vmul.f32 %v254, %v252
    %v256 = vxor.u32 %v255, 2147483648
    %v257 = vsel %vm174, %v256, %v255
    %v258 = vsub.s32 4, %v234
    %v259 = vsel %vm174, %v258, %v234
    %v260 = vsel %vm173, %v67, %v257
    %v261 = vsel %vm173, 0, %v259
    %v262 = vcosq.f32.pop %v260
    %v263 = vsinq.f32.pop %v260
    %vm264 = vweird.f32 %v67
    %v265 = vadd.s32 %v261, 3
    %v266 = vand.u32 %v265, 3
    %vm267 = vcmp.lt.s32.totalorder %v266, 2
    %vm268 = vcmp.eq.s32.totalorder %v266, 0
    %v269 = vxor.u32 %v263, 2147483648
    %v270 = vsel %vm268, %v262, %v269
    %vm271 = vcmp.eq.s32.totalorder %v266, 2
    %v272 = vxor.u32 %v262, 2147483648
    %v273 = vsel %vm271, %v272, %v263
    %v274 = vsel %vm267, %v270, %v273
    %v275 = vsel %vm264, nan, %v274
    %vm276 = vcmask 261120
    %v277 = vsel %vm276, %v171, 0.0
    %278 = vadd.xlane.f32.xlu0 %v277
    %v279 = vpop.xlane.xlu0 %278
    %v280 = vsel %vm276, %v275, 0.0
    %281 = vadd.xlane.f32.xlu0 %v280
    %v282 = vpop.xlane.xlu0 %281
    %v283 = vrcp.pop 32.0
    %v284 = vmul.f32 %v279, %v283
    %v285 = vmul.f32 %v282, %v283
    %v286 = vsub.f32 %v171, %v284
    %v287 = vsub.f32 %v275, %v285
    %v288 = vmul.f32 %v286, %v286
    %v289 = vmul.f32 %v287, %v287
    %v290 = vsel %vm276, %v288, 0.0
    %291 = vadd.xlane.f32.xlu0 %v290
    %v292 = vpop.xlane.xlu0 %291
    %v293 = vsel %vm276, %v289, 0.0
    %294 = vadd.xlane.f32.xlu0 %v293
    %v295 = vpop.xlane.xlu0 %294
    %v296 = vmul.f32 %v292, %v283
    %v297 = vmul.f32 %v295, %v283
    %v298 = vadd.f32 %v296, 1e-05
    %v299 = vadd.f32 %v297, 1e-05
    %v300 = vrsqrt.pop %v298
    %v301 = vrsqrt.pop %v299
    %v302 = vmul.f32 %v286, %v300
    %v303 = vmul.f32 %v287, %v301
    %v304 = vlaneseq
    %v305 = vshrl.u32 %v304, 7
    %v306 = vsub.s32 4, %v305
    %v307 = vrot.slane %v18, %v306
    %v308 = vmul.f32 %v302, %v307
    %v309 = vmul.f32 %v303, %v307
    %v310 = vlaneseq
    %v311 = vshrl.u32 %v310, 7
    %v312 = vsub.s32 5, %v311
    %v313 = vrot.slane %v18, %v312
    %v314 = vadd.f32 %v308, %v313
    %v315 = vadd.f32 %v309, %v313
    %317 = vset.pattern.permute.xlu0 0
    %318 = vperm.xlu0 %317, %v19
    %v319 = vpop.permute.xlu0 %318
    %322 = vset.pattern.permute.xlu0 0
    %323 = vperm.xlu0 %322, %v20
    %v324 = vpop.permute.xlu0 %323
    %v326 = vlaneseq
    %v327 = vshrl.u32 %v326, 7
    %v328 = vsub.s32 2, %v327
    %v329 = vrot.slane %v18, %v328
    %v330 = vmul.f32 %v319, %v329
    %v331 = vmul.f32 %v324, %v329
    %v332 = vlaneseq
    %v333 = vshrl.u32 %v332, 7
    %v334 = vsub.s32 3, %v333
    %v335 = vrot.slane %v18, %v334
    %v336 = vadd.f32 %v330, %v335
    %v337 = vadd.f32 %v331, %v335
    %v338 = vand.u32 2147483647, %v336
    %vm339 = vcmp.le.f32.partialorder %v338, 0.7853982
    %vm340 = vcmp.lt.s32.totalorder %v336, 0
    %v341 = vand.u32 %v336, 2139095040
    %v342 = vshrl.u32 %v341, 23
    %v343 = vsub.s32 %v342, 127
    %v344 = vand.u32 2147483647, %v336
    %v345 = vand.u32 %v344, 8388607
    %v346 = vor.u32 %v345, 8388608
    %v347 = vsub.s32 0, %v346
    %v348 = vadd.s32 %v343, 1
    %vm349 = vcmp.gt.s32.totalorder %v348, 0
    %v350 = vsel %vm349, %v348, 0
    %v351 = vshrl.u32 %v350, 5
    %v352 = vand.u32 %v350, 31
    %v353 = vsub.s32 32, %v352
    %v354 = vshrl.u32 683565275, %v353
    %v355 = vshll.u32 683565275, %v352
    %v356 = vshrl.u32 2475754826, %v353
    %v357 = vor.u32 %v355, %v356
    %v358 = vshll.u32 2475754826, %v352
    %v359 = vshrl.u32 2131351028, %v353
    %v360 = vor.u32 %v358, %v359
    %v361 = vshll.u32 2131351028, %v352
    %v362 = vshrl.u32 2102212464, %v353
    %v363 = vor.u32 %v361, %v362
    %v364 = vshll.u32 2102212464, %v352
    %v365 = vshrl.u32 920167782, %v353
    %v366 = vor.u32 %v364, %v365
    %v367 = vshll.u32 920167782, %v352
    %v368 = vshrl.u32 1326507024, %v353
    %v369 = vor.u32 %v367, %v368
    %vm370 = vcmp.lt.s32.totalorder %v351, 1
    %vm371 = vcmp.lt.s32.totalorder %v351, 2
    %vm372 = vcmp.lt.s32.totalorder %v351, 3
    %vm373 = vcmp.lt.s32.totalorder %v351, 4
    %v374 = vsel %vm370, %v354, %v357
    %v375 = vsel %vm373, %v363, 2102212464
    %v376 = vsel %vm372, %v360, %v375
    %v377 = vsel %vm371, %v374, %v376
    %v378 = vsel %vm370, %v357, %v360
    %v379 = vsel %vm373, %v366, 920167782
    %v380 = vsel %vm372, %v363, %v379
    %v381 = vsel %vm371, %v378, %v380
    %v382 = vsel %vm370, %v360, %v363
    %v383 = vsel %vm373, %v369, 1326507024
    %v384 = vsel %vm372, %v366, %v383
    %v385 = vsel %vm371, %v382, %v384
    %v386 = vshll.u32 %v346, 8
    %v387 = vmul.u32.u64.compose %v386, %v385
    %v388 = vextract.low.u32 %v387
    %v389 = vextract.high.u32 %v387
    %v390 = vmul.u32.u64.compose %v386, %v381
    %v391 = vextract.low.u32 %v390
    %v392 = vextract.high.u32 %v390
    %v393 = vmul.u32 %v386, %v377
    %v394 = vadd.s32 %v389, %v391
    %vm395 = vc.u32 %v389, %v391
    %v396 = vadd.s32 %v392, 1
    %v397 = vsel %vm395, %v396, %v392
    %v398 = vadd.s32 %v393, %v397
    %v399 = vadd.s32 %v398, 536870912
    %v400 = vshrl.u32 %v399, 30
    %v401 = vshll.u32 %v400, 30
    %v402 = vsub.s32 %v398, %v401
    %vm403 = vcmp.lt.s32.totalorder %v402, 0
    %v404 = vsub.s32 0, %v402
    %v405 = vsel %vm403, %v404, %v402
    %v406 = vclz %v405
    %v407 = vsub.s32 %v406, 2
    %vm408 = vcmp.gt.s32.totalorder 0, %v407
    %v409 = vsel %vm408, 0, %v407
    %v410 = vsub.s32 32, %v409
    %v411 = vshll.u32 %v402, %v409
    %v412 = vshrl.u32 %v394, %v410
    %v413 = vor.u32 %v411, %v412
    %v414 = vsub.s32 4294967266, %v409
    %v415 = vadd.s32 %v414, 127
    %v416 = vshll.u32 %v415, 23
    %v417 = vor.u32 4788187, %v416
    %v418 = vand.u32 2147483647, %v417
    %v420 = vcvt.s32.f32 %v413
    %v421 = vmul.f32 %v420, %v418
    %v422 = vxor.u32 %v421, 2147483648
    %v423 = vsel %vm340, %v422, %v421
    %v424 = vsub.s32 4, %v400
    %v425 = vsel %vm340, %v424, %v400
    %v426 = vsel %vm339, %v336, %v423
    %v427 = vsel %vm339, 0, %v425
    %v428 = vcosq.f32.pop %v426
    %v429 = vsinq.f32.pop %v426
    %vm430 = vweird.f32 %v336
    %v431 = vand.u32 %v427, 3
    %vm432 = vcmp.lt.s32.totalorder %v431, 2
    %vm433 = vcmp.eq.s32.totalorder %v431, 0
    %v434 = vxor.u32 %v429, 2147483648
    %v435 = vsel %vm433, %v428, %v434
    %vm436 = vcmp.eq.s32.totalorder %v431, 2
    %v437 = vxor.u32 %v428, 2147483648
    %v438 = vsel %vm436, %v437, %v429
    %v439 = vsel %vm432, %v435, %v438
    %v440 = vsel %vm430, nan, %v439
    %v441 = vand.u32 2147483647, %v337
    %vm442 = vcmp.le.f32.partialorder %v441, 0.7853982
    %vm443 = vcmp.lt.s32.totalorder %v337, 0
    %v444 = vand.u32 %v337, 2139095040
    %v445 = vshrl.u32 %v444, 23
    %v446 = vsub.s32 %v445, 127
    %v447 = vand.u32 2147483647, %v337
    %v448 = vand.u32 %v447, 8388607
    %v449 = vor.u32 %v448, 8388608
    %v450 = vsub.s32 0, %v449
    %v451 = vadd.s32 %v446, 1
    %vm452 = vcmp.gt.s32.totalorder %v451, 0
    %v453 = vsel %vm452, %v451, 0
    %v454 = vshrl.u32 %v453, 5
    %v455 = vand.u32 %v453, 31
    %v456 = vsub.s32 32, %v455
    %v457 = vshrl.u32 683565275, %v456
    %v458 = vshll.u32 683565275, %v455
    %v459 = vshrl.u32 2475754826, %v456
    %v460 = vor.u32 %v458, %v459
    %v461 = vshll.u32 2475754826, %v455
    %v462 = vshrl.u32 2131351028, %v456
    %v463 = vor.u32 %v461, %v462
    %v464 = vshll.u32 2131351028, %v455
    %v465 = vshrl.u32 2102212464, %v456
    %v466 = vor.u32 %v464, %v465
    %v467 = vshll.u32 2102212464, %v455
    %v468 = vshrl.u32 920167782, %v456
    %v469 = vor.u32 %v467, %v468
    %v470 = vshll.u32 920167782, %v455
    %v471 = vshrl.u32 1326507024, %v456
    %v472 = vor.u32 %v470, %v471
    %vm473 = vcmp.lt.s32.totalorder %v454, 1
    %vm474 = vcmp.lt.s32.totalorder %v454, 2
    %vm475 = vcmp.lt.s32.totalorder %v454, 3
    %vm476 = vcmp.lt.s32.totalorder %v454, 4
    %v477 = vsel %vm473, %v457, %v460
    %v478 = vsel %vm476, %v466, 2102212464
    %v479 = vsel %vm475, %v463, %v478
    %v480 = vsel %vm474, %v477, %v479
    %v481 = vsel %vm473, %v460, %v463
    %v482 = vsel %vm476, %v469, 920167782
    %v483 = vsel %vm475, %v466, %v482
    %v484 = vsel %vm474, %v481, %v483
    %v485 = vsel %vm473, %v463, %v466
    %v486 = vsel %vm476, %v472, 1326507024
    %v487 = vsel %vm475, %v469, %v486
    %v488 = vsel %vm474, %v485, %v487
    %v489 = vshll.u32 %v449, 8
    %v490 = vmul.u32.u64.compose %v489, %v488
    %v491 = vextract.low.u32 %v490
    %v492 = vextract.high.u32 %v490
    %v493 = vmul.u32.u64.compose %v489, %v484
    %v494 = vextract.low.u32 %v493
    %v495 = vextract.high.u32 %v493
    %v496 = vmul.u32 %v489, %v480
    %v497 = vadd.s32 %v492, %v494
    %vm498 = vc.u32 %v492, %v494
    %v499 = vadd.s32 %v495, 1
    %v500 = vsel %vm498, %v499, %v495
    %v501 = vadd.s32 %v496, %v500
    %v502 = vadd.s32 %v501, 536870912
    %v503 = vshrl.u32 %v502, 30
    %v504 = vshll.u32 %v503, 30
    %v505 = vsub.s32 %v501, %v504
    %vm506 = vcmp.lt.s32.totalorder %v505, 0
    %v507 = vsub.s32 0, %v505
    %v508 = vsel %vm506, %v507, %v505
    %v509 = vclz %v508
    %v510 = vsub.s32 %v509, 2
    %vm511 = vcmp.gt.s32.totalorder 0, %v510
    %v512 = vsel %vm511, 0, %v510
    %v513 = vsub.s32 32, %v512
    %v514 = vshll.u32 %v505, %v512
    %v515 = vshrl.u32 %v497, %v513
    %v516 = vor.u32 %v514, %v515
    %v517 = vsub.s32 4294967266, %v512
    %v518 = vadd.s32 %v517, 127
    %v519 = vshll.u32 %v518, 23
    %v520 = vor.u32 4788187, %v519
    %v521 = vand.u32 2147483647, %v520
    %v523 = vcvt.s32.f32 %v516
    %v524 = vmul.f32 %v523, %v521
    %v525 = vxor.u32 %v524, 2147483648
    %v526 = vsel %vm443, %v525, %v524
    %v527 = vsub.s32 4, %v503
    %v528 = vsel %vm443, %v527, %v503
    %v529 = vsel %vm442, %v337, %v526
    %v530 = vsel %vm442, 0, %v528
    %v531 = vcosq.f32.pop %v529
    %v532 = vsinq.f32.pop %v529
    %vm533 = vweird.f32 %v337
    %v534 = vand.u32 %v530, 3
    %vm535 = vcmp.lt.s32.totalorder %v534, 2
    %vm536 = vcmp.eq.s32.totalorder %v534, 0
    %v537 = vxor.u32 %v532, 2147483648
    %v538 = vsel %vm536, %v531, %v537
    %vm539 = vcmp.eq.s32.totalorder %v534, 2
    %v540 = vxor.u32 %v531, 2147483648
    %v541 = vsel %vm539, %v540, %v532
    %v542 = vsel %vm535, %v538, %v541
    %v543 = vsel %vm533, nan, %v542
    %v544 = vmul.f32 %v440, 0.17677669
    %v545 = vmul.f32 %v543, 0.17677669
    %v546 = vsel %vm276, %v544, 0.0
    %547 = vadd.xlane.f32.xlu0 %v546
    %v548 = vpop.xlane.xlu0 %547
    %v549 = vsel %vm276, %v545, 0.0
    %550 = vadd.xlane.f32.xlu0 %v549
    %v551 = vpop.xlane.xlu0 %550
    %v552 = vmul.f32 %v548, %v283
    %v553 = vmul.f32 %v551, %v283
    %v554 = vsub.f32 %v544, %v552
    %v555 = vsub.f32 %v545, %v553
    %v556 = vmul.f32 %v554, %v554
    %v557 = vmul.f32 %v555, %v555
    %v558 = vsel %vm276, %v556, 0.0
    %559 = vadd.xlane.f32.xlu0 %v558
    %v560 = vpop.xlane.xlu0 %559
    %v561 = vsel %vm276, %v557, 0.0
    %562 = vadd.xlane.f32.xlu0 %v561
    %v563 = vpop.xlane.xlu0 %562
    %v564 = vmul.f32 %v560, %v283
    %v565 = vmul.f32 %v563, %v283
    %v566 = vadd.f32 %v564, 1e-05
    %v567 = vadd.f32 %v565, 1e-05
    %v568 = vrsqrt.pop %v566
    %v569 = vrsqrt.pop %v567
    %v570 = vmul.f32 %v554, %v568
    %v571 = vmul.f32 %v555, %v569
    %v572 = vmul.f32 %v570, %v307
    %v573 = vmul.f32 %v571, %v307
    %v574 = vadd.f32 %v572, %v313
    %v575 = vadd.f32 %v573, %v313
    %v576 = vlaneseq
    %v577 = vand.u32 %v576, 127
    %578 = vset.pattern.permute.xlu0 1
    %579 = vperm.xlu0 %578, %v21
    %v580 = vpop.permute.xlu0 %579
    %581 = vset.pattern.permute.xlu0 1
    %582 = vperm.xlu0 %581, %v22
    %v583 = vpop.permute.xlu0 %582
    %vm584 = vcmp.eq.s32.totalorder %v580, %v577
    %vm585 = vcmp.eq.s32.totalorder %v583, %v577
    %v586 = vsel %vm584, 1, 0
    %v587 = vsel %vm585, 1, 0
    %v588 = vcvt.s32.f32 %v586
    %v589 = vcvt.s32.f32 %v587
    %590 = vset.pattern.permute.xlu0 2
    %591 = vperm.xlu0 %590, %v21
    %v592 = vpop.permute.xlu0 %591
    %593 = vset.pattern.permute.xlu0 2
    %594 = vperm.xlu0 %593, %v22
    %v595 = vpop.permute.xlu0 %594
    %vm596 = vcmp.eq.s32.totalorder %v592, %v577
    %vm597 = vcmp.eq.s32.totalorder %v595, %v577
    %v598 = vsel %vm596, 1, 0
    %v599 = vsel %vm597, 1, 0
    %v600 = vcvt.s32.f32 %v598
    %v601 = vcvt.s32.f32 %v599
    %v602 = vld [vmem:[%s2] sm:$0xff]
    %v603 = vld [vmem:[%s2 + $0x8] sm:$0xff]
    %v604 = vld [vmem:[%s2 + $0x10] sm:$0xff]
    %v605 = vld [vmem:[%s2 + $0x18] sm:$0xff]
    %v606 = vld [vmem:[%s2 + $0x20] sm:$0xff]
    %v607 = vld [vmem:[%s2 + $0x28] sm:$0xff]
    %v608 = vld [vmem:[%s2 + $0x30] sm:$0xff]
    %v609 = vld [vmem:[%s2 + $0x38] sm:$0xff]
    %v610 = vld [vmem:[%s2 + $0x40] sm:$0xff]
    %v611 = vld [vmem:[%s2 + $0x48] sm:$0xff]
    %v612 = vld [vmem:[%s2 + $0x50] sm:$0xff]
    %v613 = vld [vmem:[%s2 + $0x58] sm:$0xff]
    %v614 = vld [vmem:[%s2 + $0x60] sm:$0xff]
    %v615 = vld [vmem:[%s2 + $0x68] sm:$0xff]
    %v616 = vld [vmem:[%s2 + $0x70] sm:$0xff]
    %v617 = vld [vmem:[%s2 + $0x78] sm:$0xff]
    %618 = vmatprep.subr.mxu0 0.0
    %v619 = vand.u32 %v602, 4294901760
    %620 = vmatpush1.msra.mxu0 %v619
    %621 = vmatprep.subr.mxu0 0.0
    %v622 = vand.u32 %v603, 4294901760
    %623 = vmatpush1.msra.mxu0 %v622
    %624 = vmatprep.subr.mxu0 0.0
    %v625 = vand.u32 %v604, 4294901760
    %626 = vmatpush1.msra.mxu0 %v625
    %627 = vmatprep.subr.mxu0 0.0
    %v628 = vand.u32 %v605, 4294901760
    %629 = vmatpush1.msra.mxu0 %v628
    %630 = vmatprep.subr.mxu0 0.0
    %v631 = vand.u32 %v606, 4294901760
    %632 = vmatpush1.msra.mxu0 %v631
    %633 = vmatprep.subr.mxu0 0.0
    %v634 = vand.u32 %v607, 4294901760
    %635 = vmatpush1.msra.mxu0 %v634
    %636 = vmatprep.subr.mxu0 0.0
    %v637 = vand.u32 %v608, 4294901760
    %638 = vmatpush1.msra.mxu0 %v637
    %639 = vmatprep.subr.mxu0 0.0
    %v640 = vand.u32 %v609, 4294901760
    %641 = vmatpush1.msra.mxu0 %v640
    %642 = vmatprep.subr.mxu0 0.0
    %v643 = vand.u32 %v610, 4294901760
    %644 = vmatpush1.msra.mxu0 %v643
    %645 = vmatprep.subr.mxu0 0.0
    %v646 = vand.u32 %v611, 4294901760
    %647 = vmatpush1.msra.mxu0 %v646
    %648 = vmatprep.subr.mxu0 0.0
    %v649 = vand.u32 %v612, 4294901760
    %650 = vmatpush1.msra.mxu0 %v649
    %651 = vmatprep.subr.mxu0 0.0
    %v652 = vand.u32 %v613, 4294901760
    %653 = vmatpush1.msra.mxu0 %v652
    %654 = vmatprep.subr.mxu0 0.0
    %v655 = vand.u32 %v614, 4294901760
    %656 = vmatpush1.msra.mxu0 %v655
    %657 = vmatprep.subr.mxu0 0.0
    %v658 = vand.u32 %v615, 4294901760
    %659 = vmatpush1.msra.mxu0 %v658
    %660 = vmatprep.subr.mxu0 0.0
    %v661 = vand.u32 %v616, 4294901760
    %662 = vmatpush1.msra.mxu0 %v661
    %663 = vmatprep.subr.mxu0 0.0
    %v664 = vand.u32 %v617, 4294901760
    %665 = vmatpush1.msra.mxu0 %v664
    %666 = vmatprep.subr.mxu0 0.0
    %667 = vmatpush1.msra.mxu0 0.0
    %668 = vmatprep.subr.mxu0 0.0
    %669 = vmatpush1.msra.mxu0 0.0
    %670 = vmatprep.subr.mxu0 0.0
    %671 = vmatpush1.msra.mxu0 0.0
    %672 = vmatprep.subr.mxu0 0.0
    %673 = vmatpush1.msra.mxu0 0.0
    %674 = vmatprep.subr.mxu0 0.0
    %675 = vmatpush1.msra.mxu0 0.0
    %676 = vmatprep.subr.mxu0 0.0
    %677 = vmatpush1.msra.mxu0 0.0
    %678 = vmatprep.subr.mxu0 0.0
    %679 = vmatpush1.msra.mxu0 0.0
    %680 = vmatprep.subr.mxu0 0.0
    %681 = vmatpush1.msra.mxu0 0.0
    %682 = vmatprep.subr.mxu0 0.0
    %683 = vmatpush1.msra.mxu0 0.0
    %684 = vmatprep.subr.mxu0 0.0
    %685 = vmatpush1.msra.mxu0 0.0
    %686 = vmatprep.subr.mxu0 0.0
    %687 = vmatpush1.msra.mxu0 0.0
    %688 = vmatprep.subr.mxu0 0.0
    %689 = vmatpush1.msra.mxu0 0.0
    %690 = vmatprep.subr.mxu0 0.0
    %691 = vmatpush1.msra.mxu0 0.0
    %692 = vmatprep.subr.mxu0 0.0
    %693 = vmatpush1.msra.mxu0 0.0
    %694 = vmatprep.subr.mxu0 0.0
    %695 = vmatpush1.msra.mxu0 0.0
    %696 = vmatprep.subr.mxu0 0.0
    %697 = vmatpush1.msra.mxu0 0.0
    %698 = vmatprep.mubr.f32.mxu0 0.0
    %v699 = vand.u32 %v588, 4294901760
    %v700 = vsub.f32 %v588, %v699
    %v701 = vand.u32 %v700, 4294901760
    %v702 = vsub.f32 %v700, %v701
    %v703 = vand.u32 %v702, 4294901760
    %704 = vmatmul.mubr.f32.gmra.mrb[0].mxu0 %v703
    %v705 = vpop.f32.mrb[0].mxu0
    %v706 = vadd.f32 0.0, %v705
    %v707 = vpop.f32.mrb[0].mxu0
    %708 = vmatprep.mubr.f32.mxu0 0.0
    %v709 = vand.u32 %v589, 4294901760
    %v710 = vsub.f32 %v589, %v709
    %v711 = vand.u32 %v710, 4294901760
    %v712 = vsub.f32 %v710, %v711
    %v713 = vand.u32 %v712, 4294901760
    %714 = vmatmul.mubr.f32.gmra.mrb[0].mxu0 %v713
    %v715 = vpop.f32.mrb[0].mxu0
    %v716 = vadd.f32 0.0, %v715
    %v717 = vpop.f32.mrb[0].mxu0
    %718 = vdwg.mxu0
    %719 = vmatprep.subr.mxu0 0.0
    %v720 = vand.u32 %v602, 4294901760
    %v721 = vsub.f32 %v602, %v720
    %v722 = vand.u32 %v721, 4294901760
    %v723 = vsub.f32 %v721, %v722
    %v724 = vand.u32 %v723, 4294901760
    %725 = vmatpush1.msra.mxu0 %v724
    %726 = vmatprep.subr.mxu0 0.0
    %v727 = vand.u32 %v603, 4294901760
    %v728 = vsub.f32 %v603, %v727
    %v729 = vand.u32 %v728, 4294901760
    %v730 = vsub.f32 %v728, %v729
    %v731 = vand.u32 %v730, 4294901760
    %732 = vmatpush1.msra.mxu0 %v731
    %733 = vmatprep.subr.mxu0 0.0
    %v734 = vand.u32 %v604, 4294901760
    %v735 = vsub.f32 %v604, %v734
    %v736 = vand.u32 %v735, 4294901760
    %v737 = vsub.f32 %v735, %v736
    %v738 = vand.u32 %v737, 4294901760
    %739 = vmatpush1.msra.mxu0 %v738
    %740 = vmatprep.subr.mxu0 0.0
    %v741 = vand.u32 %v605, 4294901760
    %v742 = vsub.f32 %v605, %v741
    %v743 = vand.u32 %v742, 4294901760
    %v744 = vsub.f32 %v742, %v743
    %v745 = vand.u32 %v744, 4294901760
    %746 = vmatpush1.msra.mxu0 %v745
    %747 = vmatprep.subr.mxu0 0.0
    %v748 = vand.u32 %v606, 4294901760
    %v749 = vsub.f32 %v606, %v748
    %v750 = vand.u32 %v749, 4294901760
    %v751 = vsub.f32 %v749, %v750
    %v752 = vand.u32 %v751, 4294901760
    %753 = vmatpush1.msra.mxu0 %v752
    %754 = vmatprep.subr.mxu0 0.0
    %v755 = vand.u32 %v607, 4294901760
    %v756 = vsub.f32 %v607, %v755
    %v757 = vand.u32 %v756, 4294901760
    %v758 = vsub.f32 %v756, %v757
    %v759 = vand.u32 %v758, 4294901760
    %760 = vmatpush1.msra.mxu0 %v759
    %761 = vmatprep.subr.mxu0 0.0
    %v762 = vand.u32 %v608, 4294901760
    %v763 = vsub.f32 %v608, %v762
    %v764 = vand.u32 %v763, 4294901760
    %v765 = vsub.f32 %v763, %v764
    %v766 = vand.u32 %v765, 4294901760
    %767 = vmatpush1.msra.mxu0 %v766
    %768 = vmatprep.subr.mxu0 0.0
    %v769 = vand.u32 %v609, 4294901760
    %v770 = vsub.f32 %v609, %v769
    %v771 = vand.u32 %v770, 4294901760
    %v772 = vsub.f32 %v770, %v771
    %v773 = vand.u32 %v772, 4294901760
    %774 = vmatpush1.msra.mxu0 %v773
    %775 = vmatprep.subr.mxu0 0.0
    %v776 = vand.u32 %v610, 4294901760
    %v777 = vsub.f32 %v610, %v776
    %v778 = vand.u32 %v777, 4294901760
    %v779 = vsub.f32 %v777, %v778
    %v780 = vand.u32 %v779, 4294901760
    %781 = vmatpush1.msra.mxu0 %v780
    %782 = vmatprep.subr.mxu0 0.0
    %v783 = vand.u32 %v611, 4294901760
    %v784 = vsub.f32 %v611, %v783
    %v785 = vand.u32 %v784, 4294901760
    %v786 = vsub.f32 %v784, %v785
    %v787 = vand.u32 %v786, 4294901760
    %788 = vmatpush1.msra.mxu0 %v787
    %789 = vmatprep.subr.mxu0 0.0
    %v790 = vand.u32 %v612, 4294901760
    %v791 = vsub.f32 %v612, %v790
    %v792 = vand.u32 %v791, 4294901760
    %v793 = vsub.f32 %v791, %v792
    %v794 = vand.u32 %v793, 4294901760
    %795 = vmatpush1.msra.mxu0 %v794
    %796 = vmatprep.subr.mxu0 0.0
    %v797 = vand.u32 %v613, 4294901760
    %v798 = vsub.f32 %v613, %v797
    %v799 = vand.u32 %v798, 4294901760
    %v800 = vsub.f32 %v798, %v799
    %v801 = vand.u32 %v800, 4294901760
    %802 = vmatpush1.msra.mxu0 %v801
    %803 = vmatprep.subr.mxu0 0.0
    %v804 = vand.u32 %v614, 4294901760
    %v805 = vsub.f32 %v614, %v804
    %v806 = vand.u32 %v805, 4294901760
    %v807 = vsub.f32 %v805, %v806
    %v808 = vand.u32 %v807, 4294901760
    %809 = vmatpush1.msra.mxu0 %v808
    %810 = vmatprep.subr.mxu0 0.0
    %v811 = vand.u32 %v615, 4294901760
    %v812 = vsub.f32 %v615, %v811
    %v813 = vand.u32 %v812, 4294901760
    %v814 = vsub.f32 %v812, %v813
    %v815 = vand.u32 %v814, 4294901760
    %816 = vmatpush1.msra.mxu0 %v815
    %817 = vmatprep.subr.mxu0 0.0
    %v818 = vand.u32 %v616, 4294901760
    %v819 = vsub.f32 %v616, %v818
    %v820 = vand.u32 %v819, 4294901760
    %v821 = vsub.f32 %v819, %v820
    %v822 = vand.u32 %v821, 4294901760
    %823 = vmatpush1.msra.mxu0 %v822
    %824 = vmatprep.subr.mxu0 0.0
    %v825 = vand.u32 %v617, 4294901760
    %v826 = vsub.f32 %v617, %v825
    %v827 = vand.u32 %v826, 4294901760
    %v828 = vsub.f32 %v826, %v827
    %v829 = vand.u32 %v828, 4294901760
    %830 = vmatpush1.msra.mxu0 %v829
    %831 = vmatprep.subr.mxu0 0.0
    %832 = vmatpush1.msra.mxu0 0.0
    %833 = vmatprep.subr.mxu0 0.0
    %834 = vmatpush1.msra.mxu0 0.0
    %835 = vmatprep.subr.mxu0 0.0
    %836 = vmatpush1.msra.mxu0 0.0
    %837 = vmatprep.subr.mxu0 0.0
    %838 = vmatpush1.msra.mxu0 0.0
    %839 = vmatprep.subr.mxu0 0.0
    %840 = vmatpush1.msra.mxu0 0.0
    %841 = vmatprep.subr.mxu0 0.0
    %842 = vmatpush1.msra.mxu0 0.0
    %843 = vmatprep.subr.mxu0 0.0
    %844 = vmatpush1.msra.mxu0 0.0
    %845 = vmatprep.subr.mxu0 0.0
    %846 = vmatpush1.msra.mxu0 0.0
    %847 = vmatprep.subr.mxu0 0.0
    %848 = vmatpush1.msra.mxu0 0.0
    %849 = vmatprep.subr.mxu0 0.0
    %850 = vmatpush1.msra.mxu0 0.0
    %851 = vmatprep.subr.mxu0 0.0
    %852 = vmatpush1.msra.mxu0 0.0
    %853 = vmatprep.subr.mxu0 0.0
    %854 = vmatpush1.msra.mxu0 0.0
    %855 = vmatprep.subr.mxu0 0.0
    %856 = vmatpush1.msra.mxu0 0.0
    %857 = vmatprep.subr.mxu0 0.0
    %858 = vmatpush1.msra.mxu0 0.0
    %859 = vmatprep.subr.mxu0 0.0
    %860 = vmatpush1.msra.mxu0 0.0
    %861 = vmatprep.subr.mxu0 0.0
    %862 = vmatpush1.msra.mxu0 0.0
    %863 = vmatprep.mubr.f32.mxu0 0.0
    %v864 = vand.u32 %v588, 4294901760
    %865 = vmatmul.mubr.f32.gmra.mrb[0].mxu0 %v864
    %v866 = vpop.f32.mrb[0].mxu0
    %v867 = vadd.f32 %v706, %v866
    %v868 = vpop.f32.mrb[0].mxu0
    %869 = vmatprep.mubr.f32.mxu0 0.0
    %v870 = vand.u32 %v589, 4294901760
    %871 = vmatmul.mubr.f32.gmra.mrb[0].mxu0 %v870
    %v872 = vpop.f32.mrb[0].mxu0
    %v873 = vadd.f32 %v716, %v872
    %v874 = vpop.f32.mrb[0].mxu0
    %875 = vdwg.mxu0
    %876 = vmatprep.subr.mxu0 0.0
    %v877 = vand.u32 %v602, 4294901760
    %v878 = vsub.f32 %v602, %v877
    %879 = vmatpush1.msra.mxu0 %v878
    %880 = vmatprep.subr.mxu0 0.0
    %v881 = vand.u32 %v603, 4294901760
    %v882 = vsub.f32 %v603, %v881
    %883 = vmatpush1.msra.mxu0 %v882
    %884 = vmatprep.subr.mxu0 0.0
    %v885 = vand.u32 %v604, 4294901760
    %v886 = vsub.f32 %v604, %v885
    %887 = vmatpush1.msra.mxu0 %v886
    %888 = vmatprep.subr.mxu0 0.0
    %v889 = vand.u32 %v605, 4294901760
    %v890 = vsub.f32 %v605, %v889
    %891 = vmatpush1.msra.mxu0 %v890
    %892 = vmatprep.subr.mxu0 0.0
    %v893 = vand.u32 %v606, 4294901760
    %v894 = vsub.f32 %v606, %v893
    %895 = vmatpush1.msra.mxu0 %v894
    %896 = vmatprep.subr.mxu0 0.0
    %v897 = vand.u32 %v607, 4294901760
    %v898 = vsub.f32 %v607, %v897
    %899 = vmatpush1.msra.mxu0 %v898
    %900 = vmatprep.subr.mxu0 0.0
    %v901 = vand.u32 %v608, 4294901760
    %v902 = vsub.f32 %v608, %v901
    %903 = vmatpush1.msra.mxu0 %v902
    %904 = vmatprep.subr.mxu0 0.0
    %v905 = vand.u32 %v609, 4294901760
    %v906 = vsub.f32 %v609, %v905
    %907 = vmatpush1.msra.mxu0 %v906
    %908 = vmatprep.subr.mxu0 0.0
    %v909 = vand.u32 %v610, 4294901760
    %v910 = vsub.f32 %v610, %v909
    %911 = vmatpush1.msra.mxu0 %v910
    %912 = vmatprep.subr.mxu0 0.0
    %v913 = vand.u32 %v611, 4294901760
    %v914 = vsub.f32 %v611, %v913
    %915 = vmatpush1.msra.mxu0 %v914
    %916 = vmatprep.subr.mxu0 0.0
    %v917 = vand.u32 %v612, 4294901760
    %v918 = vsub.f32 %v612, %v917
    %919 = vmatpush1.msra.mxu0 %v918
    %920 = vmatprep.subr.mxu0 0.0
    %v921 = vand.u32 %v613, 4294901760
    %v922 = vsub.f32 %v613, %v921
    %923 = vmatpush1.msra.mxu0 %v922
    %924 = vmatprep.subr.mxu0 0.0
    %v925 = vand.u32 %v614, 4294901760
    %v926 = vsub.f32 %v614, %v925
    %927 = vmatpush1.msra.mxu0 %v926
    %928 = vmatprep.subr.mxu0 0.0
    %v929 = vand.u32 %v615, 4294901760
    %v930 = vsub.f32 %v615, %v929
    %931 = vmatpush1.msra.mxu0 %v930
    %932 = vmatprep.subr.mxu0 0.0
    %v933 = vand.u32 %v616, 4294901760
    %v934 = vsub.f32 %v616, %v933
    %935 = vmatpush1.msra.mxu0 %v934
    %936 = vmatprep.subr.mxu0 0.0
    %v937 = vand.u32 %v617, 4294901760
    %v938 = vsub.f32 %v617, %v937
    %939 = vmatpush1.msra.mxu0 %v938
    %940 = vmatprep.subr.mxu0 0.0
    %941 = vmatpush1.msra.mxu0 0.0
    %942 = vmatprep.subr.mxu0 0.0
    %943 = vmatpush1.msra.mxu0 0.0
    %944 = vmatprep.subr.mxu0 0.0
    %945 = vmatpush1.msra.mxu0 0.0
    %946 = vmatprep.subr.mxu0 0.0
    %947 = vmatpush1.msra.mxu0 0.0
    %948 = vmatprep.subr.mxu0 0.0
    %949 = vmatpush1.msra.mxu0 0.0
    %950 = vmatprep.subr.mxu0 0.0
    %951 = vmatpush1.msra.mxu0 0.0
    %952 = vmatprep.subr.mxu0 0.0
    %953 = vmatpush1.msra.mxu0 0.0
    %954 = vmatprep.subr.mxu0 0.0
    %955 = vmatpush1.msra.mxu0 0.0
    %956 = vmatprep.subr.mxu0 0.0
    %957 = vmatpush1.msra.mxu0 0.0
    %958 = vmatprep.subr.mxu0 0.0
    %959 = vmatpush1.msra.mxu0 0.0
    %960 = vmatprep.subr.mxu0 0.0
    %961 = vmatpush1.msra.mxu0 0.0
    %962 = vmatprep.subr.mxu0 0.0
    %963 = vmatpush1.msra.mxu0 0.0
    %964 = vmatprep.subr.mxu0 0.0
    %965 = vmatpush1.msra.mxu0 0.0
    %966 = vmatprep.subr.mxu0 0.0
    %967 = vmatpush1.msra.mxu0 0.0
    %968 = vmatprep.subr.mxu0 0.0
    %969 = vmatpush1.msra.mxu0 0.0
    %970 = vmatprep.subr.mxu0 0.0
    %971 = vmatpush1.msra.mxu0 0.0
    %972 = vmatprep.mubr.f32.mxu0 0.0
    %v973 = vand.u32 %v588, 4294901760
    %v974 = vsub.f32 %v588, %v973
    %975 = vmatmul.mubr.f32.gmra.mrb[0].mxu0 %v974
    %v976 = vpop.f32.mrb[0].mxu0
    %v977 = vadd.f32 %v867, %v976
    %v978 = vpop.f32.mrb[0].mxu0
    %979 = vmatprep.mubr.f32.mxu0 0.0
    %v980 = vand.u32 %v589, 4294901760
    %v981 = vsub.f32 %v589, %v980
    %982 = vmatmul.mubr.f32.gmra.mrb[0].mxu0 %v981
    %v983 = vpop.f32.mrb[0].mxu0
    %v984 = vadd.f32 %v873, %v983
    %v985 = vpop.f32.mrb[0].mxu0
    %986 = vdwg.mxu0
    %987 = vmatprep.subr.mxu0 0.0
    %v988 = vand.u32 %v602, 4294901760
    %989 = vmatpush1.msra.mxu0 %v988
    %990 = vmatprep.subr.mxu0 0.0
    %v991 = vand.u32 %v603, 4294901760
    %992 = vmatpush1.msra.mxu0 %v991
    %993 = vmatprep.subr.mxu0 0.0
    %v994 = vand.u32 %v604, 4294901760
    %995 = vmatpush1.msra.mxu0 %v994
    %996 = vmatprep.subr.mxu0 0.0
    %v997 = vand.u32 %v605, 4294901760
    %998 = vmatpush1.msra.mxu0 %v997
    %999 = vmatprep.subr.mxu0 0.0
    %v1000 = vand.u32 %v606, 4294901760
    %1001 = vmatpush1.msra.mxu0 %v1000
    %1002 = vmatprep.subr.mxu0 0.0
    %v1003 = vand.u32 %v607, 4294901760
    %1004 = vmatpush1.msra.mxu0 %v1003
    %1005 = vmatprep.subr.mxu0 0.0
    %v1006 = vand.u32 %v608, 4294901760
    %1007 = vmatpush1.msra.mxu0 %v1006
    %1008 = vmatprep.subr.mxu0 0.0
    %v1009 = vand.u32 %v609, 4294901760
    %1010 = vmatpush1.msra.mxu0 %v1009
    %1011 = vmatprep.subr.mxu0 0.0
    %v1012 = vand.u32 %v610, 4294901760
    %1013 = vmatpush1.msra.mxu0 %v1012
    %1014 = vmatprep.subr.mxu0 0.0
    %v1015 = vand.u32 %v611, 4294901760
    %1016 = vmatpush1.msra.mxu0 %v1015
    %1017 = vmatprep.subr.mxu0 0.0
    %v1018 = vand.u32 %v612, 4294901760
    %1019 = vmatpush1.msra.mxu0 %v1018
    %1020 = vmatprep.subr.mxu0 0.0
    %v1021 = vand.u32 %v613, 4294901760
    %1022 = vmatpush1.msra.mxu0 %v1021
    %1023 = vmatprep.subr.mxu0 0.0
    %v1024 = vand.u32 %v614, 4294901760
    %1025 = vmatpush1.msra.mxu0 %v1024
    %1026 = vmatprep.subr.mxu0 0.0
    %v1027 = vand.u32 %v615, 4294901760
    %1028 = vmatpush1.msra.mxu0 %v1027
    %1029 = vmatprep.subr.mxu0 0.0
    %v1030 = vand.u32 %v616, 4294901760
    %1031 = vmatpush1.msra.mxu0 %v1030
    %1032 = vmatprep.subr.mxu0 0.0
    %v1033 = vand.u32 %v617, 4294901760
    %1034 = vmatpush1.msra.mxu0 %v1033
    %1035 = vmatprep.subr.mxu0 0.0
    %1036 = vmatpush1.msra.mxu0 0.0
    %1037 = vmatprep.subr.mxu0 0.0
    %1038 = vmatpush1.msra.mxu0 0.0
    %1039 = vmatprep.subr.mxu0 0.0
    %1040 = vmatpush1.msra.mxu0 0.0
    %1041 = vmatprep.subr.mxu0 0.0
    %1042 = vmatpush1.msra.mxu0 0.0
    %1043 = vmatprep.subr.mxu0 0.0
    %1044 = vmatpush1.msra.mxu0 0.0
    %1045 = vmatprep.subr.mxu0 0.0
    %1046 = vmatpush1.msra.mxu0 0.0
    %1047 = vmatprep.subr.mxu0 0.0
    %1048 = vmatpush1.msra.mxu0 0.0
    %1049 = vmatprep.subr.mxu0 0.0
    %1050 = vmatpush1.msra.mxu0 0.0
    %1051 = vmatprep.subr.mxu0 0.0
    %1052 = vmatpush1.msra.mxu0 0.0
    %1053 = vmatprep.subr.mxu0 0.0
    %1054 = vmatpush1.msra.mxu0 0.0
    %1055 = vmatprep.subr.mxu0 0.0
    %1056 = vmatpush1.msra.mxu0 0.0
    %1057 = vmatprep.subr.mxu0 0.0
    %1058 = vmatpush1.msra.mxu0 0.0
    %1059 = vmatprep.subr.mxu0 0.0
    %1060 = vmatpush1.msra.mxu0 0.0
    %1061 = vmatprep.subr.mxu0 0.0
    %1062 = vmatpush1.msra.mxu0 0.0
    %1063 = vmatprep.subr.mxu0 0.0
    %1064 = vmatpush1.msra.mxu0 0.0
    %1065 = vmatprep.subr.mxu0 0.0
    %1066 = vmatpush1.msra.mxu0 0.0
    %1067 = vmatprep.mubr.f32.mxu0 0.0
    %v1068 = vand.u32 %v588, 4294901760
    %v1069 = vsub.f32 %v588, %v1068
    %v1070 = vand.u32 %v1069, 4294901760
    %1071 = vmatmul.mubr.f32.gmra.mrb[0].mxu0 %v1070
    %v1072 = vpop.f32.mrb[0].mxu0
    %v1073 = vadd.f32 %v977, %v1072
    %v1074 = vpop.f32.mrb[0].mxu0
    %1075 = vmatprep.mubr.f32.mxu0 0.0
    %v1076 = vand.u32 %v589, 4294901760
    %v1077 = vsub.f32 %v589, %v1076
    %v1078 = vand.u32 %v1077, 4294901760
    %1079 = vmatmul.mubr.f32.gmra.mrb[0].mxu0 %v1078
    %v1080 = vpop.f32.mrb[0].mxu0
    %v1081 = vadd.f32 %v984, %v1080
    %v1082 = vpop.f32.mrb[0].mxu0
    %1083 = vdwg.mxu0
    %1084 = vmatprep.subr.mxu0 0.0
    %v1085 = vand.u32 %v602, 4294901760
    %v1086 = vsub.f32 %v602, %v1085
    %v1087 = vand.u32 %v1086, 4294901760
    %1088 = vmatpush1.msra.mxu0 %v1087
    %1089 = vmatprep.subr.mxu0 0.0
    %v1090 = vand.u32 %v603, 4294901760
    %v1091 = vsub.f32 %v603, %v1090
    %v1092 = vand.u32 %v1091, 4294901760
    %1093 = vmatpush1.msra.mxu0 %v1092
    %1094 = vmatprep.subr.mxu0 0.0
    %v1095 = vand.u32 %v604, 4294901760
    %v1096 = vsub.f32 %v604, %v1095
    %v1097 = vand.u32 %v1096, 4294901760
    %1098 = vmatpush1.msra.mxu0 %v1097
    %1099 = vmatprep.subr.mxu0 0.0
    %v1100 = vand.u32 %v605, 4294901760
    %v1101 = vsub.f32 %v605, %v1100
    %v1102 = vand.u32 %v1101, 4294901760
    %1103 = vmatpush1.msra.mxu0 %v1102
    %1104 = vmatprep.subr.mxu0 0.0
    %v1105 = vand.u32 %v606, 4294901760
    %v1106 = vsub.f32 %v606, %v1105
    %v1107 = vand.u32 %v1106, 4294901760
    %1108 = vmatpush1.msra.mxu0 %v1107
    %1109 = vmatprep.subr.mxu0 0.0
    %v1110 = vand.u32 %v607, 4294901760
    %v1111 = vsub.f32 %v607, %v1110
    %v1112 = vand.u32 %v1111, 4294901760
    %1113 = vmatpush1.msra.mxu0 %v1112
    %1114 = vmatprep.subr.mxu0 0.0
    %v1115 = vand.u32 %v608, 4294901760
    %v1116 = vsub.f32 %v608, %v1115
    %v1117 = vand.u32 %v1116, 4294901760
    %1118 = vmatpush1.msra.mxu0 %v1117
    %1119 = vmatprep.subr.mxu0 0.0
    %v1120 = vand.u32 %v609, 4294901760
    %v1121 = vsub.f32 %v609, %v1120
    %v1122 = vand.u32 %v1121, 4294901760
    %1123 = vmatpush1.msra.mxu0 %v1122
    %1124 = vmatprep.subr.mxu0 0.0
    %v1125 = vand.u32 %v610, 4294901760
    %v1126 = vsub.f32 %v610, %v1125
    %v1127 = vand.u32 %v1126, 4294901760
    %1128 = vmatpush1.msra.mxu0 %v1127
    %1129 = vmatprep.subr.mxu0 0.0
    %v1130 = vand.u32 %v611, 4294901760
    %v1131 = vsub.f32 %v611, %v1130
    %v1132 = vand.u32 %v1131, 4294901760
    %1133 = vmatpush1.msra.mxu0 %v1132
    %1134 = vmatprep.subr.mxu0 0.0
    %v1135 = vand.u32 %v612, 4294901760
    %v1136 = vsub.f32 %v612, %v1135
    %v1137 = vand.u32 %v1136, 4294901760
    %1138 = vmatpush1.msra.mxu0 %v1137
    %1139 = vmatprep.subr.mxu0 0.0
    %v1140 = vand.u32 %v613, 4294901760
    %v1141 = vsub.f32 %v613, %v1140
    %v1142 = vand.u32 %v1141, 4294901760
    %1143 = vmatpush1.msra.mxu0 %v1142
    %1144 = vmatprep.subr.mxu0 0.0
    %v1145 = vand.u32 %v614, 4294901760
    %v1146 = vsub.f32 %v614, %v1145
    %v1147 = vand.u32 %v1146, 4294901760
    %1148 = vmatpush1.msra.mxu0 %v1147
    %1149 = vmatprep.subr.mxu0 0.0
    %v1150 = vand.u32 %v615, 4294901760
    %v1151 = vsub.f32 %v615, %v1150
    %v1152 = vand.u32 %v1151, 4294901760
    %1153 = vmatpush1.msra.mxu0 %v1152
    %1154 = vmatprep.subr.mxu0 0.0
    %v1155 = vand.u32 %v616, 4294901760
    %v1156 = vsub.f32 %v616, %v1155
    %v1157 = vand.u32 %v1156, 4294901760
    %1158 = vmatpush1.msra.mxu0 %v1157
    %1159 = vmatprep.subr.mxu0 0.0
    %v1160 = vand.u32 %v617, 4294901760
    %v1161 = vsub.f32 %v617, %v1160
    %v1162 = vand.u32 %v1161, 4294901760
    %1163 = vmatpush1.msra.mxu0 %v1162
    %1164 = vmatprep.subr.mxu0 0.0
    %1165 = vmatpush1.msra.mxu0 0.0
    %1166 = vmatprep.subr.mxu0 0.0
    %1167 = vmatpush1.msra.mxu0 0.0
    %1168 = vmatprep.subr.mxu0 0.0
    %1169 = vmatpush1.msra.mxu0 0.0
    %1170 = vmatprep.subr.mxu0 0.0
    %1171 = vmatpush1.msra.mxu0 0.0
    %1172 = vmatprep.subr.mxu0 0.0
    %1173 = vmatpush1.msra.mxu0 0.0
    %1174 = vmatprep.subr.mxu0 0.0
    %1175 = vmatpush1.msra.mxu0 0.0
    %1176 = vmatprep.subr.mxu0 0.0
    %1177 = vmatpush1.msra.mxu0 0.0
    %1178 = vmatprep.subr.mxu0 0.0
    %1179 = vmatpush1.msra.mxu0 0.0
    %1180 = vmatprep.subr.mxu0 0.0
    %1181 = vmatpush1.msra.mxu0 0.0
    %1182 = vmatprep.subr.mxu0 0.0
    %1183 = vmatpush1.msra.mxu0 0.0
    %1184 = vmatprep.subr.mxu0 0.0
    %1185 = vmatpush1.msra.mxu0 0.0
    %1186 = vmatprep.subr.mxu0 0.0
    %1187 = vmatpush1.msra.mxu0 0.0
    %1188 = vmatprep.subr.mxu0 0.0
    %1189 = vmatpush1.msra.mxu0 0.0
    %1190 = vmatprep.subr.mxu0 0.0
    %1191 = vmatpush1.msra.mxu0 0.0
    %1192 = vmatprep.subr.mxu0 0.0
    %1193 = vmatpush1.msra.mxu0 0.0
    %1194 = vmatprep.subr.mxu0 0.0
    %1195 = vmatpush1.msra.mxu0 0.0
    %1196 = vmatprep.mubr.f32.mxu0 0.0
    %v1197 = vand.u32 %v588, 4294901760
    %1198 = vmatmul.mubr.f32.gmra.mrb[0].mxu0 %v1197
    %v1199 = vpop.f32.mrb[0].mxu0
    %v1200 = vadd.f32 %v1073, %v1199
    %v1201 = vpop.f32.mrb[0].mxu0
    %1202 = vmatprep.mubr.f32.mxu0 0.0
    %v1203 = vand.u32 %v589, 4294901760
    %1204 = vmatmul.mubr.f32.gmra.mrb[0].mxu0 %v1203
    %v1205 = vpop.f32.mrb[0].mxu0
    %v1206 = vadd.f32 %v1081, %v1205
    %v1207 = vpop.f32.mrb[0].mxu0
    %1208 = vdwg.mxu0
    %1209 = vmatprep.subr.mxu0 0.0
    %v1210 = vand.u32 %v602, 4294901760
    %1211 = vmatpush1.msra.mxu0 %v1210
    %1212 = vmatprep.subr.mxu0 0.0
    %v1213 = vand.u32 %v603, 4294901760
    %1214 = vmatpush1.msra.mxu0 %v1213
    %1215 = vmatprep.subr.mxu0 0.0
    %v1216 = vand.u32 %v604, 4294901760
    %1217 = vmatpush1.msra.mxu0 %v1216
    %1218 = vmatprep.subr.mxu0 0.0
    %v1219 = vand.u32 %v605, 4294901760
    %1220 = vmatpush1.msra.mxu0 %v1219
    %1221 = vmatprep.subr.mxu0 0.0
    %v1222 = vand.u32 %v606, 4294901760
    %1223 = vmatpush1.msra.mxu0 %v1222
    %1224 = vmatprep.subr.mxu0 0.0
    %v1225 = vand.u32 %v607, 4294901760
    %1226 = vmatpush1.msra.mxu0 %v1225
    %1227 = vmatprep.subr.mxu0 0.0
    %v1228 = vand.u32 %v608, 4294901760
    %1229 = vmatpush1.msra.mxu0 %v1228
    %1230 = vmatprep.subr.mxu0 0.0
    %v1231 = vand.u32 %v609, 4294901760
    %1232 = vmatpush1.msra.mxu0 %v1231
    %1233 = vmatprep.subr.mxu0 0.0
    %v1234 = vand.u32 %v610, 4294901760
    %1235 = vmatpush1.msra.mxu0 %v1234
    %1236 = vmatprep.subr.mxu0 0.0
    %v1237 = vand.u32 %v611, 4294901760
    %1238 = vmatpush1.msra.mxu0 %v1237
    %1239 = vmatprep.subr.mxu0 0.0
    %v1240 = vand.u32 %v612, 4294901760
    %1241 = vmatpush1.msra.mxu0 %v1240
    %1242 = vmatprep.subr.mxu0 0.0
    %v1243 = vand.u32 %v613, 4294901760
    %1244 = vmatpush1.msra.mxu0 %v1243
    %1245 = vmatprep.subr.mxu0 0.0
    %v1246 = vand.u32 %v614, 4294901760
    %1247 = vmatpush1.msra.mxu0 %v1246
    %1248 = vmatprep.subr.mxu0 0.0
    %v1249 = vand.u32 %v615, 4294901760
    %1250 = vmatpush1.msra.mxu0 %v1249
    %1251 = vmatprep.subr.mxu0 0.0
    %v1252 = vand.u32 %v616, 4294901760
    %1253 = vmatpush1.msra.mxu0 %v1252
    %1254 = vmatprep.subr.mxu0 0.0
    %v1255 = vand.u32 %v617, 4294901760
    %1256 = vmatpush1.msra.mxu0 %v1255
    %1257 = vmatprep.subr.mxu0 0.0
    %1258 = vmatpush1.msra.mxu0 0.0
    %1259 = vmatprep.subr.mxu0 0.0
    %1260 = vmatpush1.msra.mxu0 0.0
    %1261 = vmatprep.subr.mxu0 0.0
    %1262 = vmatpush1.msra.mxu0 0.0
    %1263 = vmatprep.subr.mxu0 0.0
    %1264 = vmatpush1.msra.mxu0 0.0
    %1265 = vmatprep.subr.mxu0 0.0
    %1266 = vmatpush1.msra.mxu0 0.0
    %1267 = vmatprep.subr.mxu0 0.0
    %1268 = vmatpush1.msra.mxu0 0.0
    %1269 = vmatprep.subr.mxu0 0.0
    %1270 = vmatpush1.msra.mxu0 0.0
    %1271 = vmatprep.subr.mxu0 0.0
    %1272 = vmatpush1.msra.mxu0 0.0
    %1273 = vmatprep.subr.mxu0 0.0
    %1274 = vmatpush1.msra.mxu0 0.0
    %1275 = vmatprep.subr.mxu0 0.0
    %1276 = vmatpush1.msra.mxu0 0.0
    %1277 = vmatprep.subr.mxu0 0.0
    %1278 = vmatpush1.msra.mxu0 0.0
    %1279 = vmatprep.subr.mxu0 0.0
    %1280 = vmatpush1.msra.mxu0 0.0
    %1281 = vmatprep.subr.mxu0 0.0
    %1282 = vmatpush1.msra.mxu0 0.0
    %1283 = vmatprep.subr.mxu0 0.0
    %1284 = vmatpush1.msra.mxu0 0.0
    %1285 = vmatprep.subr.mxu0 0.0
    %1286 = vmatpush1.msra.mxu0 0.0
    %1287 = vmatprep.subr.mxu0 0.0
    %1288 = vmatpush1.msra.mxu0 0.0
    %1289 = vmatprep.mubr.f32.mxu0 0.0
    %v1290 = vand.u32 %v588, 4294901760
    %1291 = vmatmul.mubr.f32.gmra.mrb[0].mxu0 %v1290
    %v1292 = vpop.f32.mrb[0].mxu0
    %v1293 = vadd.f32 %v1200, %v1292
    %v1294 = vpop.f32.mrb[0].mxu0
    %1295 = vmatprep.mubr.f32.mxu0 0.0
    %v1296 = vand.u32 %v589, 4294901760
    %1297 = vmatmul.mubr.f32.gmra.mrb[0].mxu0 %v1296
    %v1298 = vpop.f32.mrb[0].mxu0
    %v1299 = vadd.f32 %v1206, %v1298
    %v1300 = vpop.f32.mrb[0].mxu0
    %1301 = vdwg.mxu0
    %v1302 = vsel %vm276, %v1293, 0.0
    %1303 = vadd.xlane.f32.xlu0 %v1302
    %v1304 = vpop.xlane.xlu0 %1303
    %v1305 = vsel %vm276, %v1299, 0.0
    %1306 = vadd.xlane.f32.xlu0 %v1305
    %v1307 = vpop.xlane.xlu0 %1306
    %v1308 = vmul.f32 %v1304, %v283
    %v1309 = vmul.f32 %v1307, %v283
    %v1310 = vsub.f32 %v1293, %v1308
    %v1311 = vsub.f32 %v1299, %v1309
    %v1312 = vmul.f32 %v1310, %v1310
    %v1313 = vmul.f32 %v1311, %v1311
    %v1314 = vsel %vm276, %v1312, 0.0
    %1315 = vadd.xlane.f32.xlu0 %v1314
    %v1316 = vpop.xlane.xlu0 %1315
    %v1317 = vsel %vm276, %v1313, 0.0
    %1318 = vadd.xlane.f32.xlu0 %v1317
    %v1319 = vpop.xlane.xlu0 %1318
    %v1320 = vmul.f32 %v1316, %v283
    %v1321 = vmul.f32 %v1319, %v283
    %v1322 = vadd.f32 %v1320, 1e-05
    %v1323 = vadd.f32 %v1321, 1e-05
    %v1324 = vrsqrt.pop %v1322
    %v1325 = vrsqrt.pop %v1323
    %v1326 = vmul.f32 %v1310, %v1324
    %v1327 = vmul.f32 %v1311, %v1325
    %v1328 = vmul.f32 %v1326, %v307
    %v1329 = vmul.f32 %v1327, %v307
    %v1330 = vadd.f32 %v1328, %v313
    %v1331 = vadd.f32 %v1329, %v313
    %1334 = vrot.lane.b32.xlu0 %v1293, 96
    %v1335 = vpop.permute.xlu0 %1334
    %1336 = vrot.lane.b32.xlu0 %v1299, 96
    %v1337 = vpop.permute.xlu0 %1336
    %v1340 = vsel %vm276, %v1335, 0.0
    %1341 = vadd.xlane.f32.xlu0 %v1340
    %v1342 = vpop.xlane.xlu0 %1341
    %v1343 = vsel %vm276, %v1337, 0.0
    %1344 = vadd.xlane.f32.xlu0 %v1343
    %v1345 = vpop.xlane.xlu0 %1344
    %v1346 = vmul.f32 %v1342, %v283
    %v1347 = vmul.f32 %v1345, %v283
    %v1348 = vsub.f32 %v1293, %v1346
    %v1349 = vsub.f32 %v1299, %v1347
    %v1350 = vmul.f32 %v1348, %v1348
    %v1351 = vmul.f32 %v1349, %v1349
    %1354 = vrot.lane.b32.xlu0 %v1350, 96
    %v1355 = vpop.permute.xlu0 %1354
    %1356 = vrot.lane.b32.xlu0 %v1351, 96
    %v1357 = vpop.permute.xlu0 %1356
    %v1360 = vsel %vm276, %v1355, 0.0
    %1361 = vadd.xlane.f32.xlu0 %v1360
    %v1362 = vpop.xlane.xlu0 %1361
    %v1363 = vsel %vm276, %v1357, 0.0
    %1364 = vadd.xlane.f32.xlu0 %v1363
    %v1365 = vpop.xlane.xlu0 %1364
    %v1366 = vmul.f32 %v1362, %v283
    %v1367 = vmul.f32 %v1365, %v283
    %v1368 = vadd.f32 %v1366, 1e-05
    %v1369 = vadd.f32 %v1367, 1e-05
    %v1370 = vrsqrt.pop %v1368
    %v1371 = vrsqrt.pop %v1369
    %v1372 = vmul.f32 %v1348, %v1370
    %v1373 = vmul.f32 %v1349, %v1371
    %1375 = vrot.lane.b32.xlu0 %v307, 32
    %v1376 = vpop.permute.xlu0 %1375
    %v1378 = vmul.f32 %v1372, %v1376
    %v1379 = vmul.f32 %v1373, %v1376
    %1381 = vrot.lane.b32.xlu0 %v313, 32
    %v1382 = vpop.permute.xlu0 %1381
    %v1384 = vadd.f32 %v1378, %v1382
    %v1385 = vadd.f32 %v1379, %v1382
    %v1386 = vld [vmem:[%s3] sm:$0xff]
    %v1387 = vld [vmem:[%s3 + $0x8] sm:$0xff]
    %v1388 = vld [vmem:[%s3 + $0x10] sm:$0xff]
    %v1389 = vld [vmem:[%s3 + $0x18] sm:$0xff]
    %v1390 = vld [vmem:[%s3 + $0x20] sm:$0xff]
    %v1391 = vld [vmem:[%s3 + $0x28] sm:$0xff]
    %v1392 = vld [vmem:[%s3 + $0x30] sm:$0xff]
    %v1393 = vld [vmem:[%s3 + $0x38] sm:$0xff]
    %v1394 = vld [vmem:[%s3 + $0x40] sm:$0xff]
    %v1395 = vld [vmem:[%s3 + $0x48] sm:$0xff]
    %v1396 = vld [vmem:[%s3 + $0x50] sm:$0xff]
    %v1397 = vld [vmem:[%s3 + $0x58] sm:$0xff]
    %v1398 = vld [vmem:[%s3 + $0x60] sm:$0xff]
    %v1399 = vld [vmem:[%s3 + $0x68] sm:$0xff]
    %v1400 = vld [vmem:[%s3 + $0x70] sm:$0xff]
    %v1401 = vld [vmem:[%s3 + $0x78] sm:$0xff]
    %1402 = vmatprep.subr.mxu0 0.0
    %v1403 = vand.u32 %v1386, 4294901760
    %1404 = vmatpush1.msra.mxu0 %v1403
    %1405 = vmatprep.subr.mxu0 0.0
    %v1406 = vand.u32 %v1387, 4294901760
    %1407 = vmatpush1.msra.mxu0 %v1406
    %1408 = vmatprep.subr.mxu0 0.0
    %v1409 = vand.u32 %v1388, 4294901760
    %1410 = vmatpush1.msra.mxu0 %v1409
    %1411 = vmatprep.subr.mxu0 0.0
    %v1412 = vand.u32 %v1389, 4294901760
    %1413 = vmatpush1.msra.mxu0 %v1412
    %1414 = vmatprep.subr.mxu0 0.0
    %v1415 = vand.u32 %v1390, 4294901760
    %1416 = vmatpush1.msra.mxu0 %v1415
    %1417 = vmatprep.subr.mxu0 0.0
    %v1418 = vand.u32 %v1391, 4294901760
    %1419 = vmatpush1.msra.mxu0 %v1418
    %1420 = vmatprep.subr.mxu0 0.0
    %v1421 = vand.u32 %v1392, 4294901760
    %1422 = vmatpush1.msra.mxu0 %v1421
    %1423 = vmatprep.subr.mxu0 0.0
    %v1424 = vand.u32 %v1393, 4294901760
    %1425 = vmatpush1.msra.mxu0 %v1424
    %1426 = vmatprep.subr.mxu0 0.0
    %v1427 = vand.u32 %v1394, 4294901760
    %1428 = vmatpush1.msra.mxu0 %v1427
    %1429 = vmatprep.subr.mxu0 0.0
    %v1430 = vand.u32 %v1395, 4294901760
    %1431 = vmatpush1.msra.mxu0 %v1430
    %1432 = vmatprep.subr.mxu0 0.0
    %v1433 = vand.u32 %v1396, 4294901760
    %1434 = vmatpush1.msra.mxu0 %v1433
    %1435 = vmatprep.subr.mxu0 0.0
    %v1436 = vand.u32 %v1397, 4294901760
    %1437 = vmatpush1.msra.mxu0 %v1436
    %1438 = vmatprep.subr.mxu0 0.0
    %v1439 = vand.u32 %v1398, 4294901760
    %1440 = vmatpush1.msra.mxu0 %v1439
    %1441 = vmatprep.subr.mxu0 0.0
    %v1442 = vand.u32 %v1399, 4294901760
    %1443 = vmatpush1.msra.mxu0 %v1442
    %1444 = vmatprep.subr.mxu0 0.0
    %v1445 = vand.u32 %v1400, 4294901760
    %1446 = vmatpush1.msra.mxu0 %v1445
    %1447 = vmatprep.subr.mxu0 0.0
    %v1448 = vand.u32 %v1401, 4294901760
    %1449 = vmatpush1.msra.mxu0 %v1448
    %1450 = vmatprep.subr.mxu0 0.0
    %1451 = vmatpush1.msra.mxu0 0.0
    %1452 = vmatprep.subr.mxu0 0.0
    %1453 = vmatpush1.msra.mxu0 0.0
    %1454 = vmatprep.subr.mxu0 0.0
    %1455 = vmatpush1.msra.mxu0 0.0
    %1456 = vmatprep.subr.mxu0 0.0
    %1457 = vmatpush1.msra.mxu0 0.0
    %1458 = vmatprep.subr.mxu0 0.0
    %1459 = vmatpush1.msra.mxu0 0.0
    %1460 = vmatprep.subr.mxu0 0.0
    %1461 = vmatpush1.msra.mxu0 0.0
    %1462 = vmatprep.subr.mxu0 0.0
    %1463 = vmatpush1.msra.mxu0 0.0
    %1464 = vmatprep.subr.mxu0 0.0
    %1465 = vmatpush1.msra.mxu0 0.0
    %1466 = vmatprep.subr.mxu0 0.0
    %1467 = vmatpush1.msra.mxu0 0.0
    %1468 = vmatprep.subr.mxu0 0.0
    %1469 = vmatpush1.msra.mxu0 0.0
    %1470 = vmatprep.subr.mxu0 0.0
    %1471 = vmatpush1.msra.mxu0 0.0
    %1472 = vmatprep.subr.mxu0 0.0
    %1473 = vmatpush1.msra.mxu0 0.0
    %1474 = vmatprep.subr.mxu0 0.0
    %1475 = vmatpush1.msra.mxu0 0.0
    %1476 = vmatprep.subr.mxu0 0.0
    %1477 = vmatpush1.msra.mxu0 0.0
    %1478 = vmatprep.subr.mxu0 0.0
    %1479 = vmatpush1.msra.mxu0 0.0
    %1480 = vmatprep.subr.mxu0 0.0
    %1481 = vmatpush1.msra.mxu0 0.0
    %1482 = vmatprep.mubr.f32.mxu0 0.0
    %v1483 = vand.u32 %v600, 4294901760
    %v1484 = vsub.f32 %v600, %v1483
    %v1485 = vand.u32 %v1484, 4294901760
    %v1486 = vsub.f32 %v1484, %v1485
    %v1487 = vand.u32 %v1486, 4294901760
    %1488 = vmatmul.mubr.f32.gmra.mrb[0].mxu0 %v1487
    %v1489 = vpop.f32.mrb[0].mxu0
    %v1490 = vadd.f32 0.0, %v1489
    %v1491 = vpop.f32.mrb[0].mxu0
    %1492 = vmatprep.mubr.f32.mxu0 0.0
    %v1493 = vand.u32 %v601, 4294901760
    %v1494 = vsub.f32 %v601, %v1493
    %v1495 = vand.u32 %v1494, 4294901760
    %v1496 = vsub.f32 %v1494, %v1495
    %v1497 = vand.u32 %v1496, 4294901760
    %1498 = vmatmul.mubr.f32.gmra.mrb[0].mxu0 %v1497
    %v1499 = vpop.f32.mrb[0].mxu0
    %v1500 = vadd.f32 0.0, %v1499
    %v1501 = vpop.f32.mrb[0].mxu0
    %1502 = vdwg.mxu0
    %1503 = vmatprep.subr.mxu0 0.0
    %v1504 = vand.u32 %v1386, 4294901760
    %v1505 = vsub.f32 %v1386, %v1504
    %v1506 = vand.u32 %v1505, 4294901760
    %v1507 = vsub.f32 %v1505, %v1506
    %v1508 = vand.u32 %v1507, 4294901760
    %1509 = vmatpush1.msra.mxu0 %v1508
    %1510 = vmatprep.subr.mxu0 0.0
    %v1511 = vand.u32 %v1387, 4294901760
    %v1512 = vsub.f32 %v1387, %v1511
    %v1513 = vand.u32 %v1512, 4294901760
    %v1514 = vsub.f32 %v1512, %v1513
    %v1515 = vand.u32 %v1514, 4294901760
    %1516 = vmatpush1.msra.mxu0 %v1515
    %1517 = vmatprep.subr.mxu0 0.0
    %v1518 = vand.u32 %v1388, 4294901760
    %v1519 = vsub.f32 %v1388, %v1518
    %v1520 = vand.u32 %v1519, 4294901760
    %v1521 = vsub.f32 %v1519, %v1520
    %v1522 = vand.u32 %v1521, 4294901760
    %1523 = vmatpush1.msra.mxu0 %v1522
    %1524 = vmatprep.subr.mxu0 0.0
    %v1525 = vand.u32 %v1389, 4294901760
    %v1526 = vsub.f32 %v1389, %v1525
    %v1527 = vand.u32 %v1526, 4294901760
    %v1528 = vsub.f32 %v1526, %v1527
    %v1529 = vand.u32 %v1528, 4294901760
    %1530 = vmatpush1.msra.mxu0 %v1529
    %1531 = vmatprep.subr.mxu0 0.0
    %v1532 = vand.u32 %v1390, 4294901760
    %v1533 = vsub.f32 %v1390, %v1532
    %v1534 = vand.u32 %v1533, 4294901760
    %v1535 = vsub.f32 %v1533, %v1534
    %v1536 = vand.u32 %v1535, 4294901760
    %1537 = vmatpush1.msra.mxu0 %v1536
    %1538 = vmatprep.subr.mxu0 0.0
    %v1539 = vand.u32 %v1391, 4294901760
    %v1540 = vsub.f32 %v1391, %v1539
    %v1541 = vand.u32 %v1540, 4294901760
    %v1542 = vsub.f32 %v1540, %v1541
    %v1543 = vand.u32 %v1542, 4294901760
    %1544 = vmatpush1.msra.mxu0 %v1543
    %1545 = vmatprep.subr.mxu0 0.0
    %v1546 = vand.u32 %v1392, 4294901760
    %v1547 = vsub.f32 %v1392, %v1546
    %v1548 = vand.u32 %v1547, 4294901760
    %v1549 = vsub.f32 %v1547, %v1548
    %v1550 = vand.u32 %v1549, 4294901760
    %1551 = vmatpush1.msra.mxu0 %v1550
    %1552 = vmatprep.subr.mxu0 0.0
    %v1553 = vand.u32 %v1393, 4294901760
    %v1554 = vsub.f32 %v1393, %v1553
    %v1555 = vand.u32 %v1554, 4294901760
    %v1556 = vsub.f32 %v1554, %v1555
    %v1557 = vand.u32 %v1556, 4294901760
    %1558 = vmatpush1.msra.mxu0 %v1557
    %1559 = vmatprep.subr.mxu0 0.0
    %v1560 = vand.u32 %v1394, 4294901760
    %v1561 = vsub.f32 %v1394, %v1560
    %v1562 = vand.u32 %v1561, 4294901760
    %v1563 = vsub.f32 %v1561, %v1562
    %v1564 = vand.u32 %v1563, 4294901760
    %1565 = vmatpush1.msra.mxu0 %v1564
    %1566 = vmatprep.subr.mxu0 0.0
    %v1567 = vand.u32 %v1395, 4294901760
    %v1568 = vsub.f32 %v1395, %v1567
    %v1569 = vand.u32 %v1568, 4294901760
    %v1570 = vsub.f32 %v1568, %v1569
    %v1571 = vand.u32 %v1570, 4294901760
    %1572 = vmatpush1.msra.mxu0 %v1571
    %1573 = vmatprep.subr.mxu0 0.0
    %v1574 = vand.u32 %v1396, 4294901760
    %v1575 = vsub.f32 %v1396, %v1574
    %v1576 = vand.u32 %v1575, 4294901760
    %v1577 = vsub.f32 %v1575, %v1576
    %v1578 = vand.u32 %v1577, 4294901760
    %1579 = vmatpush1.msra.mxu0 %v1578
    %1580 = vmatprep.subr.mxu0 0.0
    %v1581 = vand.u32 %v1397, 4294901760
    %v1582 = vsub.f32 %v1397, %v1581
    %v1583 = vand.u32 %v1582, 4294901760
    %v1584 = vsub.f32 %v1582, %v1583
    %v1585 = vand.u32 %v1584, 4294901760
    %1586 = vmatpush1.msra.mxu0 %v1585
    %1587 = vmatprep.subr.mxu0 0.0
    %v1588 = vand.u32 %v1398, 4294901760
    %v1589 = vsub.f32 %v1398, %v1588
    %v1590 = vand.u32 %v1589, 4294901760
    %v1591 = vsub.f32 %v1589, %v1590
    %v1592 = vand.u32 %v1591, 4294901760
    %1593 = vmatpush1.msra.mxu0 %v1592
    %1594 = vmatprep.subr.mxu0 0.0
    %v1595 = vand.u32 %v1399, 4294901760
    %v1596 = vsub.f32 %v1399, %v1595
    %v1597 = vand.u32 %v1596, 4294901760
    %v1598 = vsub.f32 %v1596, %v1597
    %v1599 = vand.u32 %v1598, 4294901760
    %1600 = vmatpush1.msra.mxu0 %v1599
    %1601 = vmatprep.subr.mxu0 0.0
    %v1602 = vand.u32 %v1400, 4294901760
    %v1603 = vsub.f32 %v1400, %v1602
    %v1604 = vand.u32 %v1603, 4294901760
    %v1605 = vsub.f32 %v1603, %v1604
    %v1606 = vand.u32 %v1605, 4294901760
    %1607 = vmatpush1.msra.mxu0 %v1606
    %1608 = vmatprep.subr.mxu0 0.0
    %v1609 = vand.u32 %v1401, 4294901760
    %v1610 = vsub.f32 %v1401, %v1609
    %v1611 = vand.u32 %v1610, 4294901760
    %v1612 = vsub.f32 %v1610, %v1611
    %v1613 = vand.u32 %v1612, 4294901760
    %1614 = vmatpush1.msra.mxu0 %v1613
    %1615 = vmatprep.subr.mxu0 0.0
    %1616 = vmatpush1.msra.mxu0 0.0
    %1617 = vmatprep.subr.mxu0 0.0
    %1618 = vmatpush1.msra.mxu0 0.0
    %1619 = vmatprep.subr.mxu0 0.0
    %1620 = vmatpush1.msra.mxu0 0.0
    %1621 = vmatprep.subr.mxu0 0.0
    %1622 = vmatpush1.msra.mxu0 0.0
    %1623 = vmatprep.subr.mxu0 0.0
    %1624 = vmatpush1.msra.mxu0 0.0
    %1625 = vmatprep.subr.mxu0 0.0
    %1626 = vmatpush1.msra.mxu0 0.0
    %1627 = vmatprep.subr.mxu0 0.0
    %1628 = vmatpush1.msra.mxu0 0.0
    %1629 = vmatprep.subr.mxu0 0.0
    %1630 = vmatpush1.msra.mxu0 0.0
    %1631 = vmatprep.subr.mxu0 0.0
    %1632 = vmatpush1.msra.mxu0 0.0
    %1633 = vmatprep.subr.mxu0 0.0
    %1634 = vmatpush1.msra.mxu0 0.0
    %1635 = vmatprep.subr.mxu0 0.0
    %1636 = vmatpush1.msra.mxu0 0.0
    %1637 = vmatprep.subr.mxu0 0.0
    %1638 = vmatpush1.msra.mxu0 0.0
    %1639 = vmatprep.subr.mxu0 0.0
    %1640 = vmatpush1.msra.mxu0 0.0
    %1641 = vmatprep.subr.mxu0 0.0
    %1642 = vmatpush1.msra.mxu0 0.0
    %1643 = vmatprep.subr.mxu0 0.0
    %1644 = vmatpush1.msra.mxu0 0.0
    %1645 = vmatprep.subr.mxu0 0.0
    %1646 = vmatpush1.msra.mxu0 0.0
    %1647 = vmatprep.mubr.f32.mxu0 0.0
    %v1648 = vand.u32 %v600, 4294901760
    %1649 = vmatmul.mubr.f32.gmra.mrb[0].mxu0 %v1648
    %v1650 = vpop.f32.mrb[0].mxu0
    %v1651 = vadd.f32 %v1490, %v1650
    %v1652 = vpop.f32.mrb[0].mxu0
    %1653 = vmatprep.mubr.f32.mxu0 0.0
    %v1654 = vand.u32 %v601, 4294901760
    %1655 = vmatmul.mubr.f32.gmra.mrb[0].mxu0 %v1654
    %v1656 = vpop.f32.mrb[0].mxu0
    %v1657 = vadd.f32 %v1500, %v1656
    %v1658 = vpop.f32.mrb[0].mxu0
    %1659 = vdwg.mxu0
    %1660 = vmatprep.subr.mxu0 0.0
    %v1661 = vand.u32 %v1386, 4294901760
    %v1662 = vsub.f32 %v1386, %v1661
    %1663 = vmatpush1.msra.mxu0 %v1662
    %1664 = vmatprep.subr.mxu0 0.0
    %v1665 = vand.u32 %v1387, 4294901760
    %v1666 = vsub.f32 %v1387, %v1665
    %1667 = vmatpush1.msra.mxu0 %v1666
    %1668 = vmatprep.subr.mxu0 0.0
    %v1669 = vand.u32 %v1388, 4294901760
    %v1670 = vsub.f32 %v1388, %v1669
    %1671 = vmatpush1.msra.mxu0 %v1670
    %1672 = vmatprep.subr.mxu0 0.0
    %v1673 = vand.u32 %v1389, 4294901760
    %v1674 = vsub.f32 %v1389, %v1673
    %1675 = vmatpush1.msra.mxu0 %v1674
    %1676 = vmatprep.subr.mxu0 0.0
    %v1677 = vand.u32 %v1390, 4294901760
    %v1678 = vsub.f32 %v1390, %v1677
    %1679 = vmatpush1.msra.mxu0 %v1678
    %1680 = vmatprep.subr.mxu0 0.0
    %v1681 = vand.u32 %v1391, 4294901760
    %v1682 = vsub.f32 %v1391, %v1681
    %1683 = vmatpush1.msra.mxu0 %v1682
    %1684 = vmatprep.subr.mxu0 0.0
    %v1685 = vand.u32 %v1392, 4294901760
    %v1686 = vsub.f32 %v1392, %v1685
    %1687 = vmatpush1.msra.mxu0 %v1686
    %1688 = vmatprep.subr.mxu0 0.0
    %v1689 = vand.u32 %v1393, 4294901760
    %v1690 = vsub.f32 %v1393, %v1689
    %1691 = vmatpush1.msra.mxu0 %v1690
    %1692 = vmatprep.subr.mxu0 0.0
    %v1693 = vand.u32 %v1394, 4294901760
    %v1694 = vsub.f32 %v1394, %v1693
    %1695 = vmatpush1.msra.mxu0 %v1694
    %1696 = vmatprep.subr.mxu0 0.0
    %v1697 = vand.u32 %v1395, 4294901760
    %v1698 = vsub.f32 %v1395, %v1697
    %1699 = vmatpush1.msra.mxu0 %v1698
    %1700 = vmatprep.subr.mxu0 0.0
    %v1701 = vand.u32 %v1396, 4294901760
    %v1702 = vsub.f32 %v1396, %v1701
    %1703 = vmatpush1.msra.mxu0 %v1702
    %1704 = vmatprep.subr.mxu0 0.0
    %v1705 = vand.u32 %v1397, 4294901760
    %v1706 = vsub.f32 %v1397, %v1705
    %1707 = vmatpush1.msra.mxu0 %v1706
    %1708 = vmatprep.subr.mxu0 0.0
    %v1709 = vand.u32 %v1398, 4294901760
    %v1710 = vsub.f32 %v1398, %v1709
    %1711 = vmatpush1.msra.mxu0 %v1710
    %1712 = vmatprep.subr.mxu0 0.0
    %v1713 = vand.u32 %v1399, 4294901760
    %v1714 = vsub.f32 %v1399, %v1713
    %1715 = vmatpush1.msra.mxu0 %v1714
    %1716 = vmatprep.subr.mxu0 0.0
    %v1717 = vand.u32 %v1400, 4294901760
    %v1718 = vsub.f32 %v1400, %v1717
    %1719 = vmatpush1.msra.mxu0 %v1718
    %1720 = vmatprep.subr.mxu0 0.0
    %v1721 = vand.u32 %v1401, 4294901760
    %v1722 = vsub.f32 %v1401, %v1721
    %1723 = vmatpush1.msra.mxu0 %v1722
    %1724 = vmatprep.subr.mxu0 0.0
    %1725 = vmatpush1.msra.mxu0 0.0
    %1726 = vmatprep.subr.mxu0 0.0
    %1727 = vmatpush1.msra.mxu0 0.0
    %1728 = vmatprep.subr.mxu0 0.0
    %1729 = vmatpush1.msra.mxu0 0.0
    %1730 = vmatprep.subr.mxu0 0.0
    %1731 = vmatpush1.msra.mxu0 0.0
    %1732 = vmatprep.subr.mxu0 0.0
    %1733 = vmatpush1.msra.mxu0 0.0
    %1734 = vmatprep.subr.mxu0 0.0
    %1735 = vmatpush1.msra.mxu0 0.0
    %1736 = vmatprep.subr.mxu0 0.0
    %1737 = vmatpush1.msra.mxu0 0.0
    %1738 = vmatprep.subr.mxu0 0.0
    %1739 = vmatpush1.msra.mxu0 0.0
    %1740 = vmatprep.subr.mxu0 0.0
    %1741 = vmatpush1.msra.mxu0 0.0
    %1742 = vmatprep.subr.mxu0 0.0
    %1743 = vmatpush1.msra.mxu0 0.0
    %1744 = vmatprep.subr.mxu0 0.0
    %1745 = vmatpush1.msra.mxu0 0.0
    %1746 = vmatprep.subr.mxu0 0.0
    %1747 = vmatpush1.msra.mxu0 0.0
    %1748 = vmatprep.subr.mxu0 0.0
    %1749 = vmatpush1.msra.mxu0 0.0
    %1750 = vmatprep.subr.mxu0 0.0
    %1751 = vmatpush1.msra.mxu0 0.0
    %1752 = vmatprep.subr.mxu0 0.0
    %1753 = vmatpush1.msra.mxu0 0.0
    %1754 = vmatprep.subr.mxu0 0.0
    %1755 = vmatpush1.msra.mxu0 0.0
    %1756 = vmatprep.mubr.f32.mxu0 0.0
    %v1757 = vand.u32 %v600, 4294901760
    %v1758 = vsub.f32 %v600, %v1757
    %1759 = vmatmul.mubr.f32.gmra.mrb[0].mxu0 %v1758
    %v1760 = vpop.f32.mrb[0].mxu0
    %v1761 = vadd.f32 %v1651, %v1760
    %v1762 = vpop.f32.mrb[0].mxu0
    %1763 = vmatprep.mubr.f32.mxu0 0.0
    %v1764 = vand.u32 %v601, 4294901760
    %v1765 = vsub.f32 %v601, %v1764
    %1766 = vmatmul.mubr.f32.gmra.mrb[0].mxu0 %v1765
    %v1767 = vpop.f32.mrb[0].mxu0
    %v1768 = vadd.f32 %v1657, %v1767
    %v1769 = vpop.f32.mrb[0].mxu0
    %1770 = vdwg.mxu0
    %1771 = vmatprep.subr.mxu0 0.0
    %v1772 = vand.u32 %v1386, 4294901760
    %1773 = vmatpush1.msra.mxu0 %v1772
    %1774 = vmatprep.subr.mxu0 0.0
    %v1775 = vand.u32 %v1387, 4294901760
    %1776 = vmatpush1.msra.mxu0 %v1775
    %1777 = vmatprep.subr.mxu0 0.0
    %v1778 = vand.u32 %v1388, 4294901760
    %1779 = vmatpush1.msra.mxu0 %v1778
    %1780 = vmatprep.subr.mxu0 0.0
    %v1781 = vand.u32 %v1389, 4294901760
    %1782 = vmatpush1.msra.mxu0 %v1781
    %1783 = vmatprep.subr.mxu0 0.0
    %v1784 = vand.u32 %v1390, 4294901760
    %1785 = vmatpush1.msra.mxu0 %v1784
    %1786 = vmatprep.subr.mxu0 0.0
    %v1787 = vand.u32 %v1391, 4294901760
    %1788 = vmatpush1.msra.mxu0 %v1787
    %1789 = vmatprep.subr.mxu0 0.0
    %v1790 = vand.u32 %v1392, 4294901760
    %1791 = vmatpush1.msra.mxu0 %v1790
    %1792 = vmatprep.subr.mxu0 0.0
    %v1793 = vand.u32 %v1393, 4294901760
    %1794 = vmatpush1.msra.mxu0 %v1793
    %1795 = vmatprep.subr.mxu0 0.0
    %v1796 = vand.u32 %v1394, 4294901760
    %1797 = vmatpush1.msra.mxu0 %v1796
    %1798 = vmatprep.subr.mxu0 0.0
    %v1799 = vand.u32 %v1395, 4294901760
    %1800 = vmatpush1.msra.mxu0 %v1799
    %1801 = vmatprep.subr.mxu0 0.0
    %v1802 = vand.u32 %v1396, 4294901760
    %1803 = vmatpush1.msra.mxu0 %v1802
    %1804 = vmatprep.subr.mxu0 0.0
    %v1805 = vand.u32 %v1397, 4294901760
    %1806 = vmatpush1.msra.mxu0 %v1805
    %1807 = vmatprep.subr.mxu0 0.0
    %v1808 = vand.u32 %v1398, 4294901760
    %1809 = vmatpush1.msra.mxu0 %v1808
    %1810 = vmatprep.subr.mxu0 0.0
    %v1811 = vand.u32 %v1399, 4294901760
    %1812 = vmatpush1.msra.mxu0 %v1811
    %1813 = vmatprep.subr.mxu0 0.0
    %v1814 = vand.u32 %v1400, 4294901760
    %1815 = vmatpush1.msra.mxu0 %v1814
    %1816 = vmatprep.subr.mxu0 0.0
    %v1817 = vand.u32 %v1401, 4294901760
    %1818 = vmatpush1.msra.mxu0 %v1817
    %1819 = vmatprep.subr.mxu0 0.0
    %1820 = vmatpush1.msra.mxu0 0.0
    %1821 = vmatprep.subr.mxu0 0.0
    %1822 = vmatpush1.msra.mxu0 0.0
    %1823 = vmatprep.subr.mxu0 0.0
    %1824 = vmatpush1.msra.mxu0 0.0
    %1825 = vmatprep.subr.mxu0 0.0
    %1826 = vmatpush1.msra.mxu0 0.0
    %1827 = vmatprep.subr.mxu0 0.0
    %1828 = vmatpush1.msra.mxu0 0.0
    %1829 = vmatprep.subr.mxu0 0.0
    %1830 = vmatpush1.msra.mxu0 0.0
    %1831 = vmatprep.subr.mxu0 0.0
    %1832 = vmatpush1.msra.mxu0 0.0
    %1833 = vmatprep.subr.mxu0 0.0
    %1834 = vmatpush1.msra.mxu0 0.0
    %1835 = vmatprep.subr.mxu0 0.0
    %1836 = vmatpush1.msra.mxu0 0.0
    %1837 = vmatprep.subr.mxu0 0.0
    %1838 = vmatpush1.msra.mxu0 0.0
    %1839 = vmatprep.subr.mxu0 0.0
    %1840 = vmatpush1.msra.mxu0 0.0
    %1841 = vmatprep.subr.mxu0 0.0
    %1842 = vmatpush1.msra.mxu0 0.0
    %1843 = vmatprep.subr.mxu0 0.0
    %1844 = vmatpush1.msra.mxu0 0.0
    %1845 = vmatprep.subr.mxu0 0.0
    %1846 = vmatpush1.msra.mxu0 0.0
    %1847 = vmatprep.subr.mxu0 0.0
    %1848 = vmatpush1.msra.mxu0 0.0
    %1849 = vmatprep.subr.mxu0 0.0
    %1850 = vmatpush1.msra.mxu0 0.0
    %1851 = vmatprep.mubr.f32.mxu0 0.0
    %v1852 = vand.u32 %v600, 4294901760
    %v1853 = vsub.f32 %v600, %v1852
    %v1854 = vand.u32 %v1853, 4294901760
    %1855 = vmatmul.mubr.f32.gmra.mrb[0].mxu0 %v1854
    %v1856 = vpop.f32.mrb[0].mxu0
    %v1857 = vadd.f32 %v1761, %v1856
    %v1858 = vpop.f32.mrb[0].mxu0
    %1859 = vmatprep.mubr.f32.mxu0 0.0
    %v1860 = vand.u32 %v601, 4294901760
    %v1861 = vsub.f32 %v601, %v1860
    %v1862 = vand.u32 %v1861, 4294901760
    %1863 = vmatmul.mubr.f32.gmra.mrb[0].mxu0 %v1862
    %v1864 = vpop.f32.mrb[0].mxu0
    %v1865 = vadd.f32 %v1768, %v1864
    %v1866 = vpop.f32.mrb[0].mxu0
    %1867 = vdwg.mxu0
    %1868 = vmatprep.subr.mxu0 0.0
    %v1869 = vand.u32 %v1386, 4294901760
    %v1870 = vsub.f32 %v1386, %v1869
    %v1871 = vand.u32 %v1870, 4294901760
    %1872 = vmatpush1.msra.mxu0 %v1871
    %1873 = vmatprep.subr.mxu0 0.0
    %v1874 = vand.u32 %v1387, 4294901760
    %v1875 = vsub.f32 %v1387, %v1874
    %v1876 = vand.u32 %v1875, 4294901760
    %1877 = vmatpush1.msra.mxu0 %v1876
    %1878 = vmatprep.subr.mxu0 0.0
    %v1879 = vand.u32 %v1388, 4294901760
    %v1880 = vsub.f32 %v1388, %v1879
    %v1881 = vand.u32 %v1880, 4294901760
    %1882 = vmatpush1.msra.mxu0 %v1881
    %1883 = vmatprep.subr.mxu0 0.0
    %v1884 = vand.u32 %v1389, 4294901760
    %v1885 = vsub.f32 %v1389, %v1884
    %v1886 = vand.u32 %v1885, 4294901760
    %1887 = vmatpush1.msra.mxu0 %v1886
    %1888 = vmatprep.subr.mxu0 0.0
    %v1889 = vand.u32 %v1390, 4294901760
    %v1890 = vsub.f32 %v1390, %v1889
    %v1891 = vand.u32 %v1890, 4294901760
    %1892 = vmatpush1.msra.mxu0 %v1891
    %1893 = vmatprep.subr.mxu0 0.0
    %v1894 = vand.u32 %v1391, 4294901760
    %v1895 = vsub.f32 %v1391, %v1894
    %v1896 = vand.u32 %v1895, 4294901760
    %1897 = vmatpush1.msra.mxu0 %v1896
    %1898 = vmatprep.subr.mxu0 0.0
    %v1899 = vand.u32 %v1392, 4294901760
    %v1900 = vsub.f32 %v1392, %v1899
    %v1901 = vand.u32 %v1900, 4294901760
    %1902 = vmatpush1.msra.mxu0 %v1901
    %1903 = vmatprep.subr.mxu0 0.0
    %v1904 = vand.u32 %v1393, 4294901760
    %v1905 = vsub.f32 %v1393, %v1904
    %v1906 = vand.u32 %v1905, 4294901760
    %1907 = vmatpush1.msra.mxu0 %v1906
    %1908 = vmatprep.subr.mxu0 0.0
    %v1909 = vand.u32 %v1394, 4294901760
    %v1910 = vsub.f32 %v1394, %v1909
    %v1911 = vand.u32 %v1910, 4294901760
    %1912 = vmatpush1.msra.mxu0 %v1911
    %1913 = vmatprep.subr.mxu0 0.0
    %v1914 = vand.u32 %v1395, 4294901760
    %v1915 = vsub.f32 %v1395, %v1914
    %v1916 = vand.u32 %v1915, 4294901760
    %1917 = vmatpush1.msra.mxu0 %v1916
    %1918 = vmatprep.subr.mxu0 0.0
    %v1919 = vand.u32 %v1396, 4294901760
    %v1920 = vsub.f32 %v1396, %v1919
    %v1921 = vand.u32 %v1920, 4294901760
    %1922 = vmatpush1.msra.mxu0 %v1921
    %1923 = vmatprep.subr.mxu0 0.0
    %v1924 = vand.u32 %v1397, 4294901760
    %v1925 = vsub.f32 %v1397, %v1924
    %v1926 = vand.u32 %v1925, 4294901760
    %1927 = vmatpush1.msra.mxu0 %v1926
    %1928 = vmatprep.subr.mxu0 0.0
    %v1929 = vand.u32 %v1398, 4294901760
    %v1930 = vsub.f32 %v1398, %v1929
    %v1931 = vand.u32 %v1930, 4294901760
    %1932 = vmatpush1.msra.mxu0 %v1931
    %1933 = vmatprep.subr.mxu0 0.0
    %v1934 = vand.u32 %v1399, 4294901760
    %v1935 = vsub.f32 %v1399, %v1934
    %v1936 = vand.u32 %v1935, 4294901760
    %1937 = vmatpush1.msra.mxu0 %v1936
    %1938 = vmatprep.subr.mxu0 0.0
    %v1939 = vand.u32 %v1400, 4294901760
    %v1940 = vsub.f32 %v1400, %v1939
    %v1941 = vand.u32 %v1940, 4294901760
    %1942 = vmatpush1.msra.mxu0 %v1941
    %1943 = vmatprep.subr.mxu0 0.0
    %v1944 = vand.u32 %v1401, 4294901760
    %v1945 = vsub.f32 %v1401, %v1944
    %v1946 = vand.u32 %v1945, 4294901760
    %1947 = vmatpush1.msra.mxu0 %v1946
    %1948 = vmatprep.subr.mxu0 0.0
    %1949 = vmatpush1.msra.mxu0 0.0
    %1950 = vmatprep.subr.mxu0 0.0
    %1951 = vmatpush1.msra.mxu0 0.0
    %1952 = vmatprep.subr.mxu0 0.0
    %1953 = vmatpush1.msra.mxu0 0.0
    %1954 = vmatprep.subr.mxu0 0.0
    %1955 = vmatpush1.msra.mxu0 0.0
    %1956 = vmatprep.subr.mxu0 0.0
    %1957 = vmatpush1.msra.mxu0 0.0
    %1958 = vmatprep.subr.mxu0 0.0
    %1959 = vmatpush1.msra.mxu0 0.0
    %1960 = vmatprep.subr.mxu0 0.0
    %1961 = vmatpush1.msra.mxu0 0.0
    %1962 = vmatprep.subr.mxu0 0.0
    %1963 = vmatpush1.msra.mxu0 0.0
    %1964 = vmatprep.subr.mxu0 0.0
    %1965 = vmatpush1.msra.mxu0 0.0
    %1966 = vmatprep.subr.mxu0 0.0
    %1967 = vmatpush1.msra.mxu0 0.0
    %1968 = vmatprep.subr.mxu0 0.0
    %1969 = vmatpush1.msra.mxu0 0.0
    %1970 = vmatprep.subr.mxu0 0.0
    %1971 = vmatpush1.msra.mxu0 0.0
    %1972 = vmatprep.subr.mxu0 0.0
    %1973 = vmatpush1.msra.mxu0 0.0
    %1974 = vmatprep.subr.mxu0 0.0
    %1975 = vmatpush1.msra.mxu0 0.0
    %1976 = vmatprep.subr.mxu0 0.0
    %1977 = vmatpush1.msra.mxu0 0.0
    %1978 = vmatprep.subr.mxu0 0.0
    %1979 = vmatpush1.msra.mxu0 0.0
    %1980 = vmatprep.mubr.f32.mxu0 0.0
    %v1981 = vand.u32 %v600, 4294901760
    %1982 = vmatmul.mubr.f32.gmra.mrb[0].mxu0 %v1981
    %v1983 = vpop.f32.mrb[0].mxu0
    %v1984 = vadd.f32 %v1857, %v1983
    %v1985 = vpop.f32.mrb[0].mxu0
    %1986 = vmatprep.mubr.f32.mxu0 0.0
    %v1987 = vand.u32 %v601, 4294901760
    %1988 = vmatmul.mubr.f32.gmra.mrb[0].mxu0 %v1987
    %v1989 = vpop.f32.mrb[0].mxu0
    %v1990 = vadd.f32 %v1865, %v1989
    %v1991 = vpop.f32.mrb[0].mxu0
    %1992 = vdwg.mxu0
    %1993 = vmatprep.subr.mxu0 0.0
    %v1994 = vand.u32 %v1386, 4294901760
    %1995 = vmatpush1.msra.mxu0 %v1994
    %1996 = vmatprep.subr.mxu0 0.0
    %v1997 = vand.u32 %v1387, 4294901760
    %1998 = vmatpush1.msra.mxu0 %v1997
    %1999 = vmatprep.subr.mxu0 0.0
    %v2000 = vand.u32 %v1388, 4294901760
    %2001 = vmatpush1.msra.mxu0 %v2000
    %2002 = vmatprep.subr.mxu0 0.0
    %v2003 = vand.u32 %v1389, 4294901760
    %2004 = vmatpush1.msra.mxu0 %v2003
    %2005 = vmatprep.subr.mxu0 0.0
    %v2006 = vand.u32 %v1390, 4294901760
    %2007 = vmatpush1.msra.mxu0 %v2006
    %2008 = vmatprep.subr.mxu0 0.0
    %v2009 = vand.u32 %v1391, 4294901760
    %2010 = vmatpush1.msra.mxu0 %v2009
    %2011 = vmatprep.subr.mxu0 0.0
    %v2012 = vand.u32 %v1392, 4294901760
    %2013 = vmatpush1.msra.mxu0 %v2012
    %2014 = vmatprep.subr.mxu0 0.0
    %v2015 = vand.u32 %v1393, 4294901760
    %2016 = vmatpush1.msra.mxu0 %v2015
    %2017 = vmatprep.subr.mxu0 0.0
    %v2018 = vand.u32 %v1394, 4294901760
    %2019 = vmatpush1.msra.mxu0 %v2018
    %2020 = vmatprep.subr.mxu0 0.0
    %v2021 = vand.u32 %v1395, 4294901760
    %2022 = vmatpush1.msra.mxu0 %v2021
    %2023 = vmatprep.subr.mxu0 0.0
    %v2024 = vand.u32 %v1396, 4294901760
    %2025 = vmatpush1.msra.mxu0 %v2024
    %2026 = vmatprep.subr.mxu0 0.0
    %v2027 = vand.u32 %v1397, 4294901760
    %2028 = vmatpush1.msra.mxu0 %v2027
    %2029 = vmatprep.subr.mxu0 0.0
    %v2030 = vand.u32 %v1398, 4294901760
    %2031 = vmatpush1.msra.mxu0 %v2030
    %2032 = vmatprep.subr.mxu0 0.0
    %v2033 = vand.u32 %v1399, 4294901760
    %2034 = vmatpush1.msra.mxu0 %v2033
    %2035 = vmatprep.subr.mxu0 0.0
    %v2036 = vand.u32 %v1400, 4294901760
    %2037 = vmatpush1.msra.mxu0 %v2036
    %2038 = vmatprep.subr.mxu0 0.0
    %v2039 = vand.u32 %v1401, 4294901760
    %2040 = vmatpush1.msra.mxu0 %v2039
    %2041 = vmatprep.subr.mxu0 0.0
    %2042 = vmatpush1.msra.mxu0 0.0
    %2043 = vmatprep.subr.mxu0 0.0
    %2044 = vmatpush1.msra.mxu0 0.0
    %2045 = vmatprep.subr.mxu0 0.0
    %2046 = vmatpush1.msra.mxu0 0.0
    %2047 = vmatprep.subr.mxu0 0.0
    %2048 = vmatpush1.msra.mxu0 0.0
    %2049 = vmatprep.subr.mxu0 0.0
    %2050 = vmatpush1.msra.mxu0 0.0
    %2051 = vmatprep.subr.mxu0 0.0
    %2052 = vmatpush1.msra.mxu0 0.0
    %2053 = vmatprep.subr.mxu0 0.0
    %2054 = vmatpush1.msra.mxu0 0.0
    %2055 = vmatprep.subr.mxu0 0.0
    %2056 = vmatpush1.msra.mxu0 0.0
    %2057 = vmatprep.subr.mxu0 0.0
    %2058 = vmatpush1.msra.mxu0 0.0
    %2059 = vmatprep.subr.mxu0 0.0
    %2060 = vmatpush1.msra.mxu0 0.0
    %2061 = vmatprep.subr.mxu0 0.0
    %2062 = vmatpush1.msra.mxu0 0.0
    %2063 = vmatprep.subr.mxu0 0.0
    %2064 = vmatpush1.msra.mxu0 0.0
    %2065 = vmatprep.subr.mxu0 0.0
    %2066 = vmatpush1.msra.mxu0 0.0
    %2067 = vmatprep.subr.mxu0 0.0
    %2068 = vmatpush1.msra.mxu0 0.0
    %2069 = vmatprep.subr.mxu0 0.0
    %2070 = vmatpush1.msra.mxu0 0.0
    %2071 = vmatprep.subr.mxu0 0.0
    %2072 = vmatpush1.msra.mxu0 0.0
    %2073 = vmatprep.mubr.f32.mxu0 0.0
    %v2074 = vand.u32 %v600, 4294901760
    %2075 = vmatmul.mubr.f32.gmra.mrb[0].mxu0 %v2074
    %v2076 = vpop.f32.mrb[0].mxu0
    %v2077 = vadd.f32 %v1984, %v2076
    %v2078 = vpop.f32.mrb[0].mxu0
    %2079 = vmatprep.mubr.f32.mxu0 0.0
    %v2080 = vand.u32 %v601, 4294901760
    %2081 = vmatmul.mubr.f32.gmra.mrb[0].mxu0 %v2080
    %v2082 = vpop.f32.mrb[0].mxu0
    %v2083 = vadd.f32 %v1990, %v2082
    %v2084 = vpop.f32.mrb[0].mxu0
    %2085 = vdwg.mxu0
    %v2086 = vsel %vm276, %v2077, 0.0
    %2087 = vadd.xlane.f32.xlu0 %v2086
    %v2088 = vpop.xlane.xlu0 %2087
    %v2089 = vsel %vm276, %v2083, 0.0
    %2090 = vadd.xlane.f32.xlu0 %v2089
    %v2091 = vpop.xlane.xlu0 %2090
    %v2092 = vmul.f32 %v2088, %v283
    %v2093 = vmul.f32 %v2091, %v283
    %v2094 = vsub.f32 %v2077, %v2092
    %v2095 = vsub.f32 %v2083, %v2093
    %v2096 = vmul.f32 %v2094, %v2094
    %v2097 = vmul.f32 %v2095, %v2095
    %v2098 = vsel %vm276, %v2096, 0.0
    %2099 = vadd.xlane.f32.xlu0 %v2098
    %v2100 = vpop.xlane.xlu0 %2099
    %v2101 = vsel %vm276, %v2097, 0.0
    %2102 = vadd.xlane.f32.xlu0 %v2101
    %v2103 = vpop.xlane.xlu0 %2102
    %v2104 = vmul.f32 %v2100, %v283
    %v2105 = vmul.f32 %v2103, %v283
    %v2106 = vadd.f32 %v2104, 1e-05
    %v2107 = vadd.f32 %v2105, 1e-05
    %v2108 = vrsqrt.pop %v2106
    %v2109 = vrsqrt.pop %v2107
    %v2110 = vmul.f32 %v2094, %v2108
    %v2111 = vmul.f32 %v2095, %v2109
    %v2112 = vmul.f32 %v2110, %v307
    %v2113 = vmul.f32 %v2111, %v307
    %v2114 = vadd.f32 %v2112, %v313
    %v2115 = vadd.f32 %v2113, %v313
    %2118 = vrot.lane.b32.xlu0 %v574, 32
    %v2119 = vpop.permute.xlu0 %2118
    %2120 = vrot.lane.b32.xlu0 %v575, 32
    %v2121 = vpop.permute.xlu0 %2120
    %2126 = vrot.lane.b32.xlu0 %v1330, 64
    %v2127 = vpop.permute.xlu0 %2126
    %2128 = vrot.lane.b32.xlu0 %v1331, 64
    %v2129 = vpop.permute.xlu0 %2128
    %2134 = vrot.lane.b32.xlu0 %v2114, 96
    %v2135 = vpop.permute.xlu0 %2134
    %2136 = vrot.lane.b32.xlu0 %v2115, 96
    %v2137 = vpop.permute.xlu0 %2136
    %2142 = vrot.lane.b32.xlu0 %v1384, 96
    %v2143 = vpop.permute.xlu0 %2142
    %2144 = vrot.lane.b32.xlu0 %v1385, 96
    %v2145 = vpop.permute.xlu0 %2144
    %v2148 = vsel %vm276, %v314, %v2119
    %v2149 = vsel %vm276, %v315, %v2121
    %vm2150 = vcmask 523264
    %v2151 = vsel %vm2150, %v2148, %v2127
    %v2152 = vsel %vm2150, %v2149, %v2129
    %vm2153 = vcmask 785408
    %v2154 = vsel %vm2153, %v2151, %v2135
    %v2155 = vsel %vm2153, %v2152, %v2137
    %2156 = vst [vmem:[#allocation2] sm:$0xff] %v2154
    %2157 = vst.msk [vmem:[#allocation2 + $0x8] sm:$0xff] %vm276, %v2143
    %2158 = vst [vmem:[#allocation2 + $0x10] sm:$0xff] %v2155
    %2159 = vst.msk [vmem:[#allocation2 + $0x18] sm:$0xff] %vm276, %v2145
    // Predicated region
    $region18: #{tpu_custom_call.1} parent=1 // pred_check
      _
    $region19: #{tpu_custom_call.1} parent=1 // pred_check_branch
      %2161 = sbr.rel (0) target = $region21
    $region20: #{tpu_custom_call.1} parent=1 // pred_region
      %s2163 = ssub.s32 512, 512
      %2164 = vsyncadd [#allocation3], %s2163
      %s2165 = sshll.u32 [#allocation2], 4
      %s2166 = int_to_ptr.vmem [resolvable:$true] %s2165
      %2171 = dma.vmem_to_hbm [thread:$0]  %s2166, 512, %s4, [#allocation3], 256, 256, 16
    $region21: #{tpu_custom_call.1} parent=1 // pred_fallthru
      _
    // Predicated region
    $region22: #{tpu_custom_call.1} parent=1 // pred_check
      _
    $region23: #{tpu_custom_call.1} parent=1 // pred_check_branch
      %2173 = sbr.rel (0) target = $region25
    $region24: #{tpu_custom_call.1} parent=1 // pred_region
      %2174 = dma.done [#allocation3], 512
    $region25: #{tpu_custom_call.1} parent=1 // pred_fallthru
      _
    %2175 = vsyncpa [#allocation3], 1

</llo_original>
